<compile_context>
chip_gen: v5e
topology: v5e:2x2
jax: 0.10.0
libtpu: 0.0.40
codegen_flags: <defaults>
</compile_context>

<pallas_src>
import functools

import jax
import jax.numpy as jnp
from jax import lax
from jax.experimental import pallas as pl
from jax.experimental.pallas import tpu as pltpu

_LANE = 128


def _round_up(v, m):
    return (v + m - 1) // m * m


def _fold_bn(gamma, beta, mean, var, eps=1e-5):
    scale = gamma / jnp.sqrt(var + eps)
    return scale, beta - mean * scale


def _prep_conv(w_hwio, gamma, beta, mean, var, cin_p, cout_p):
    """Fold BN scale into the conv weights, zero-pad channels, cast to bf16."""
    scale, bias = _fold_bn(gamma, beta, mean, var)
    kh, kw, cin, cout = w_hwio.shape
    wf = w_hwio * scale.reshape(1, 1, 1, cout)
    wf = jnp.pad(wf, ((0, 0), (0, 0), (0, cin_p - cin), (0, cout_p - cout)))
    wf = wf.reshape(kh * kw, cin_p, cout_p).astype(jnp.bfloat16)
    bp = jnp.pad(bias, (0, cout_p - cout)).reshape(1, cout_p).astype(jnp.float32)
    return wf, bp


# ----------------------------- Pallas kernel -------------------------------

def _make_block_kernel(stride, has_shortcut, Ho, Wo, Cin_p, Cmid_p):
    """Fused BasicBlock kernel: one grid step processes one batch element."""
    n_act = 4 if stride == 2 else 1
    M = Ho * Wo
    taps = [(t // 3, t % 3) for t in range(9)]

    def kernel(*refs):
        act_refs = refs[:n_act]
        w1_ref, b1_ref, w2_ref, b2_ref = refs[n_act:n_act + 4]
        if has_shortcut:
            ws_ref, bs_ref = refs[n_act + 4:n_act + 6]
            o_ref = refs[n_act + 6]
            y1p_ref = refs[n_act + 7]
        else:
            o_ref = refs[n_act + 4]
            y1p_ref = refs[n_act + 5]

        def conv1_tap(kh, kw):
            if stride == 2:
                # phase (row parity, col parity); start = (kh//2, kw//2)
                ref = act_refs[(kh % 2) * 2 + (kw % 2)]
                a = ref[kh // 2:kh // 2 + Ho, kw // 2:kw // 2 + Wo, :]
            else:
                a = act_refs[0][kh:kh + Ho, kw:kw + Wo, :]
            return a.reshape(M, Cin_p)

        # ---- conv1 (3x3, stride s) + bn1 + relu: 9 shifted-tap GEMMs ----
        acc = jnp.zeros((M, Cmid_p), jnp.float32)
        for t, (kh, kw) in enumerate(taps):
            a = conv1_tap(kh, kw).astype(jnp.bfloat16)
            acc = acc + jnp.dot(a, w1_ref[t], preferred_element_type=jnp.float32)
        y1 = jnp.maximum(acc + b1_ref[...], 0.0)

        # stage conv1 output into a zero-padded VMEM halo buffer for conv2
        y1p_ref[...] = jnp.zeros_like(y1p_ref)
        y1p_ref[1:Ho + 1, 1:Wo + 1, :] = y1.reshape(Ho, Wo, Cmid_p)

        # ---- conv2 (3x3, stride 1) + bn2: 9 shifted-tap GEMMs from VMEM ----
        acc2 = jnp.zeros((M, Cmid_p), jnp.float32)
        for t, (kh, kw) in enumerate(taps):
            a = y1p_ref[kh:kh + Ho, kw:kw + Wo, :].reshape(M, Cmid_p)
            a = a.astype(jnp.bfloat16)
            acc2 = acc2 + jnp.dot(a, w2_ref[t], preferred_element_type=jnp.float32)
        out2 = acc2 + b2_ref[...]

        # ---- shortcut: 1x1 conv + bn (projection) or identity ----
        if has_shortcut:
            if stride == 2:
                a_sc = act_refs[3][0:Ho, 0:Wo, :]          # odd-odd phase == x[::2, ::2]
            else:
                a_sc = act_refs[0][1:Ho + 1, 1:Wo + 1, :]  # un-padded x
            a_sc = a_sc.reshape(M, Cin_p).astype(jnp.bfloat16)
            ident = jnp.dot(a_sc, ws_ref[0],
                            preferred_element_type=jnp.float32) + bs_ref[...]
        else:
            # stride == 1 and Cin == Cmid: identity is the (f32) input itself
            ident = act_refs[0][1:Ho + 1, 1:Wo + 1, :].reshape(M, Cmid_p)

        # ---- residual add + relu ----
        o_ref[...] = jnp.maximum(out2 + ident, 0.0).astype(o_ref.dtype)

    return kernel


# ------------------------------ JAX wrapper --------------------------------

@functools.partial(jax.jit, static_argnums=(2,))
def basic_block_forward(x_nchw, params, stride):
    """BasicBlock forward (inference). Input/output NCHW, matching PyTorch."""
    assert stride in (1, 2)
    has_shortcut = "ws" in params

    x = jnp.transpose(x_nchw, (0, 2, 3, 1)).astype(jnp.float32)   # -> NHWC
    N, H, W, Cin = x.shape
    Cmid = params["w1"].shape[-1]
    if stride == 2:
        assert H % 2 == 0 and W % 2 == 0
    Ho = (H + 2 - 3) // stride + 1
    Wo = (W + 2 - 3) // stride + 1

    Cin_p = _round_up(Cin, _LANE)
    Cmid_p = _round_up(Cmid, _LANE)

    # BN folded into bf16 weights + f32 bias; channels padded to lane width.
    w1p, b1p = _prep_conv(params["w1"], *params["bn1"], Cin_p, Cmid_p)
    w2p, b2p = _prep_conv(params["w2"], *params["bn2"], Cmid_p, Cmid_p)

    # Spatial halo pad (+ channel pad).  For stride 2, split into the 4 stride
    # phases (no memory blow-up) so every 3x3 tap is a contiguous window.
    xp = jnp.pad(x, ((0, 0), (1, 1), (1, 1), (0, Cin_p - Cin)))
    if stride == 2:
        acts = [xp[:, a::2, b::2, :] for a in (0, 1) for b in (0, 1)]
    else:
        acts = [xp]

    args = list(acts) + [w1p, b1p, w2p, b2p]
    in_specs = [pl.BlockSpec((None,) + a.shape[1:], lambda n: (n, 0, 0, 0))
                for a in acts]
    in_specs += [
        pl.BlockSpec(w1p.shape, lambda n: (0, 0, 0)),
        pl.BlockSpec(b1p.shape, lambda n: (0, 0)),
        pl.BlockSpec(w2p.shape, lambda n: (0, 0, 0)),
        pl.BlockSpec(b2p.shape, lambda n: (0, 0)),
    ]
    if has_shortcut:
        wsp, bsp = _prep_conv(params["ws"], *params["bns"], Cin_p, Cmid_p)
        args += [wsp, bsp]
        in_specs += [pl.BlockSpec(wsp.shape, lambda n: (0, 0, 0)),
                     pl.BlockSpec(bsp.shape, lambda n: (0, 0))]

    kernel = _make_block_kernel(stride, has_shortcut, Ho, Wo, Cin_p, Cmid_p)

    out = pl.pallas_call(
        kernel,
        out_shape=jax.ShapeDtypeStruct((N, Ho * Wo, Cmid_p), jnp.float32),
        grid_spec=pltpu.PrefetchScalarGridSpec(
            num_scalar_prefetch=0,
            grid=(N,),
            in_specs=in_specs,
            out_specs=pl.BlockSpec((None, Ho * Wo, Cmid_p), lambda n: (n, 0, 0)),
            scratch_shapes=[pltpu.VMEM((Ho + 2, Wo + 2, Cmid_p), jnp.float32)],
        ),
        compiler_params=pltpu.CompilerParams(
            dimension_semantics=("parallel",),          # batch across TCs (v7x)
            vmem_limit_bytes=48 * 1024 * 1024,          # fits v5e/v6e/v7x budgets
        ),
    )(*args)

    y = out.reshape(N, Ho, Wo, Cmid_p)[..., :Cmid]
    return jnp.transpose(y, (0, 3, 1, 2))               # -> NCHW


# --------------------------- synthetic parameters ---------------------------

def make_basic_block_params(key, in_planes, planes, stride):
    """Deterministic synthetic parameters (shapes follow the PyTorch __init__)."""
    ks = jax.random.split(key, 16)
    p = {}
    # conv weights stored HWIO: [KH, KW, Cin, Cout]
    p["w1"] = jax.random.normal(ks[0], (3, 3, in_planes, planes), jnp.float32) * 0.1
    p["w2"] = jax.random.normal(ks[1], (3, 3, planes, planes), jnp.float32) * 0.1

    def bn(k0, k1, k2, k3, c):
        return (1.0 + 0.1 * jax.random.normal(k0, (c,), jnp.float32),    # gamma
                0.1 * jax.random.normal(k1, (c,), jnp.float32),          # beta
                0.1 * jax.random.normal(k2, (c,), jnp.float32),          # running mean
                1.0 + 0.5 * jax.random.uniform(k3, (c,), jnp.float32))   # running var

    p["bn1"] = bn(ks[2], ks[3], ks[4], ks[5], planes)
    p["bn2"] = bn(ks[6], ks[7], ks[8], ks[9], planes)
    if stride != 1 or in_planes != planes:
        p["ws"] = jax.random.normal(ks[10], (1, 1, in_planes, planes), jnp.float32) * 0.1
        p["bns"] = bn(ks[11], ks[12], ks[13], ks[14], planes)
    return p


# ------------------------- pure-JAX reference ------------------------------

def _ref_forward(x_nchw, params, stride):
    """Reference mirroring the kernel math: folded BN, bf16 operands, f32 acc."""
    has_shortcut = "ws" in params
    x = jnp.transpose(x_nchw, (0, 2, 3, 1)).astype(jnp.float32)
    dn = ("NHWC", "HWIO", "NHWC")

    def conv(inp, w_hwio, bn_prm, s, pad):
        scale, bias = _fold_bn(*bn_prm)
        wf = (w_hwio * scale.reshape(1, 1, 1, -1)).astype(jnp.bfloat16)
        y = lax.conv_general_dilated(
            inp.astype(jnp.bfloat16), wf, (s, s), [(pad, pad), (pad, pad)],
            dimension_numbers=dn, preferred_element_type=jnp.float32)
        return y + bias.reshape(1, 1, 1, -1)

    out = jax.nn.relu(conv(x, params["w1"], params["bn1"], stride, 1))
    out = conv(out, params["w2"], params["bn2"], 1, 1)
    if has_shortcut:
        ident = conv(x, params["ws"], params["bns"], stride, 0)
    else:
        ident = x
    return jnp.transpose(jax.nn.relu(out + ident), (0, 3, 1, 2))


# --------------------------------- main ------------------------------------

if __name__ == "__main__":
    key = jax.random.PRNGKey(0)
    k1, k2, k3, k4 = jax.random.split(key, 4)

    # Config A: downsampling block with projection shortcut (stride 2, 4 -> 8).
    xA = jax.random.normal(k1, (2, 4, 16, 16), jnp.float32)
    pA = make_basic_block_params(k2, 4, 8, 2)
    yA = jax.block_until_ready(basic_block_forward(xA, pA, 2))
    refA = _ref_forward(xA, pA, 2)
    assert yA.shape == (2, 8, 8, 8), yA.shape
    assert jnp.allclose(yA, refA, rtol=2e-3, atol=2e-3), \
        float(jnp.max(jnp.abs(yA - refA)))

    # Config B: identity block (stride 1, 8 -> 8, no projection).
    xB = jax.random.normal(k3, (2, 8, 8, 8), jnp.float32)
    pB = make_basic_block_params(k4, 8, 8, 1)
    yB = jax.block_until_ready(basic_block_forward(xB, pB, 1))
    refB = _ref_forward(xB, pB, 1)
    assert yB.shape == (2, 8, 8, 8), yB.shape
    assert jnp.allclose(yB, refB, rtol=2e-3, atol=2e-3), \
        float(jnp.max(jnp.abs(yB - refB)))

    print("KERNEL_OK")
</pallas_src>

<mosaic_0001>
module attributes {stable_mosaic.version = 11 : i64} {
  func.func @kernel(%arg0: i32, %arg1: memref<1x9x9x128xf32, #tpu.memory_space<vmem>>, %arg2: memref<1x9x9x128xf32, #tpu.memory_space<vmem>>, %arg3: memref<1x9x9x128xf32, #tpu.memory_space<vmem>>, %arg4: memref<1x9x9x128xf32, #tpu.memory_space<vmem>>, %arg5: memref<9x128x128xbf16, #tpu.memory_space<vmem>>, %arg6: memref<1x128xf32, #tpu.memory_space<vmem>>, %arg7: memref<9x128x128xbf16, #tpu.memory_space<vmem>>, %arg8: memref<1x128xf32, #tpu.memory_space<vmem>>, %arg9: memref<1x128x128xbf16, #tpu.memory_space<vmem>>, %arg10: memref<1x128xf32, #tpu.memory_space<vmem>>, %arg11: memref<1x64x128xf32, #tpu.memory_space<vmem>>, %arg12: memref<10x10x128xf32, #tpu.memory_space<vmem>>) attributes {dimension_semantics = [#tpu.dimension_semantics<parallel>], iteration_bounds = array<i64: 2>, scalar_prefetch = 0 : i64, scratch_operands = 1 : i64, tpu.core_type = #tpu.core_type<tc>, window_params = [{transform_indices = @transform_0, window_bounds = array<i64: 1, 9, 9, 128>}, {transform_indices = @transform_1, window_bounds = array<i64: 1, 9, 9, 128>}, {transform_indices = @transform_2, window_bounds = array<i64: 1, 9, 9, 128>}, {transform_indices = @transform_3, window_bounds = array<i64: 1, 9, 9, 128>}, {pipeline_mode = #tpu.pipeline_mode<synchronous>, transform_indices = @transform_4, window_bounds = array<i64: 9, 128, 128>}, {pipeline_mode = #tpu.pipeline_mode<synchronous>, transform_indices = @transform_5, window_bounds = array<i64: 1, 128>}, {pipeline_mode = #tpu.pipeline_mode<synchronous>, transform_indices = @transform_6, window_bounds = array<i64: 9, 128, 128>}, {pipeline_mode = #tpu.pipeline_mode<synchronous>, transform_indices = @transform_7, window_bounds = array<i64: 1, 128>}, {pipeline_mode = #tpu.pipeline_mode<synchronous>, transform_indices = @transform_8, window_bounds = array<i64: 1, 128, 128>}, {pipeline_mode = #tpu.pipeline_mode<synchronous>, transform_indices = @transform_9, window_bounds = array<i64: 1, 128>}, {transform_indices = @transform_10, window_bounds = array<i64: 1, 64, 128>}]} {
    %cst = arith.constant 0.000000e+00 : f32
    %0 = vector.broadcast %cst : f32 to vector<64x128xf32>
    %c0 = arith.constant 0 : index
    %c0_0 = arith.constant 0 : index
    %c0_1 = arith.constant 0 : index
    %c0_2 = arith.constant 0 : index
    %1 = vector.load %arg1[%c0, %c0_0, %c0_1, %c0_2] : memref<1x9x9x128xf32, #tpu.memory_space<vmem>>, vector<1x8x8x128xf32>
    %2 = vector.shape_cast %1 : vector<1x8x8x128xf32> to vector<8x8x128xf32>
    %3 = vector.shape_cast %2 : vector<8x8x128xf32> to vector<64x128xf32>
    %4 = arith.truncf %3 : vector<64x128xf32> to vector<64x128xbf16>
    %c0_3 = arith.constant 0 : index
    %c0_4 = arith.constant 0 : index
    %c0_5 = arith.constant 0 : index
    %5 = vector.load %arg5[%c0_3, %c0_4, %c0_5] : memref<9x128x128xbf16, #tpu.memory_space<vmem>>, vector<1x128x128xbf16>
    %6 = vector.shape_cast %5 : vector<1x128x128xbf16> to vector<128x128xbf16>
    %cst_6 = arith.constant dense<0.000000e+00> : vector<64x128xf32>
    %7 = tpu.matmul %4, %6, %cst_6 {dimension_numbers = #tpu.dot_dimension_numbers<[1], [0], [0], [1], [0, 0, 1, 1], [], []>} : vector<64x128xbf16>, vector<128x128xbf16>, vector<64x128xf32> -> vector<64x128xf32>
    %8 = arith.addf %0, %7 : vector<64x128xf32>
    %c0_7 = arith.constant 0 : index
    %c0_8 = arith.constant 0 : index
    %c0_9 = arith.constant 0 : index
    %c0_10 = arith.constant 0 : index
    %9 = vector.load %arg2[%c0_7, %c0_8, %c0_9, %c0_10] : memref<1x9x9x128xf32, #tpu.memory_space<vmem>>, vector<1x8x8x128xf32>
    %10 = vector.shape_cast %9 : vector<1x8x8x128xf32> to vector<8x8x128xf32>
    %11 = vector.shape_cast %10 : vector<8x8x128xf32> to vector<64x128xf32>
    %12 = arith.truncf %11 : vector<64x128xf32> to vector<64x128xbf16>
    %c1 = arith.constant 1 : index
    %c0_11 = arith.constant 0 : index
    %c0_12 = arith.constant 0 : index
    %13 = vector.load %arg5[%c1, %c0_11, %c0_12] : memref<9x128x128xbf16, #tpu.memory_space<vmem>>, vector<1x128x128xbf16>
    %14 = vector.shape_cast %13 : vector<1x128x128xbf16> to vector<128x128xbf16>
    %cst_13 = arith.constant dense<0.000000e+00> : vector<64x128xf32>
    %15 = tpu.matmul %12, %14, %cst_13 {dimension_numbers = #tpu.dot_dimension_numbers<[1], [0], [0], [1], [0, 0, 1, 1], [], []>} : vector<64x128xbf16>, vector<128x128xbf16>, vector<64x128xf32> -> vector<64x128xf32>
    %16 = arith.addf %8, %15 : vector<64x128xf32>
    %c0_14 = arith.constant 0 : index
    %c0_15 = arith.constant 0 : index
    %c1_16 = arith.constant 1 : index
    %c0_17 = arith.constant 0 : index
    %17 = vector.load %arg1[%c0_14, %c0_15, %c1_16, %c0_17] : memref<1x9x9x128xf32, #tpu.memory_space<vmem>>, vector<1x8x8x128xf32>
    %18 = vector.shape_cast %17 : vector<1x8x8x128xf32> to vector<8x8x128xf32>
    %19 = vector.shape_cast %18 : vector<8x8x128xf32> to vector<64x128xf32>
    %20 = arith.truncf %19 : vector<64x128xf32> to vector<64x128xbf16>
    %c2 = arith.constant 2 : index
    %c0_18 = arith.constant 0 : index
    %c0_19 = arith.constant 0 : index
    %21 = vector.load %arg5[%c2, %c0_18, %c0_19] : memref<9x128x128xbf16, #tpu.memory_space<vmem>>, vector<1x128x128xbf16>
    %22 = vector.shape_cast %21 : vector<1x128x128xbf16> to vector<128x128xbf16>
    %cst_20 = arith.constant dense<0.000000e+00> : vector<64x128xf32>
    %23 = tpu.matmul %20, %22, %cst_20 {dimension_numbers = #tpu.dot_dimension_numbers<[1], [0], [0], [1], [0, 0, 1, 1], [], []>} : vector<64x128xbf16>, vector<128x128xbf16>, vector<64x128xf32> -> vector<64x128xf32>
    %24 = arith.addf %16, %23 : vector<64x128xf32>
    %c0_21 = arith.constant 0 : index
    %c0_22 = arith.constant 0 : index
    %c0_23 = arith.constant 0 : index
    %c0_24 = arith.constant 0 : index
    %25 = vector.load %arg3[%c0_21, %c0_22, %c0_23, %c0_24] : memref<1x9x9x128xf32, #tpu.memory_space<vmem>>, vector<1x8x8x128xf32>
    %26 = vector.shape_cast %25 : vector<1x8x8x128xf32> to vector<8x8x128xf32>
    %27 = vector.shape_cast %26 : vector<8x8x128xf32> to vector<64x128xf32>
    %28 = arith.truncf %27 : vector<64x128xf32> to vector<64x128xbf16>
    %c3 = arith.constant 3 : index
    %c0_25 = arith.constant 0 : index
    %c0_26 = arith.constant 0 : index
    %29 = vector.load %arg5[%c3, %c0_25, %c0_26] : memref<9x128x128xbf16, #tpu.memory_space<vmem>>, vector<1x128x128xbf16>
    %30 = vector.shape_cast %29 : vector<1x128x128xbf16> to vector<128x128xbf16>
    %cst_27 = arith.constant dense<0.000000e+00> : vector<64x128xf32>
    %31 = tpu.matmul %28, %30, %cst_27 {dimension_numbers = #tpu.dot_dimension_numbers<[1], [0], [0], [1], [0, 0, 1, 1], [], []>} : vector<64x128xbf16>, vector<128x128xbf16>, vector<64x128xf32> -> vector<64x128xf32>
    %32 = arith.addf %24, %31 : vector<64x128xf32>
    %c0_28 = arith.constant 0 : index
    %c0_29 = arith.constant 0 : index
    %c0_30 = arith.constant 0 : index
    %c0_31 = arith.constant 0 : index
    %33 = vector.load %arg4[%c0_28, %c0_29, %c0_30, %c0_31] : memref<1x9x9x128xf32, #tpu.memory_space<vmem>>, vector<1x8x8x128xf32>
    %34 = vector.shape_cast %33 : vector<1x8x8x128xf32> to vector<8x8x128xf32>
    %35 = vector.shape_cast %34 : vector<8x8x128xf32> to vector<64x128xf32>
    %36 = arith.truncf %35 : vector<64x128xf32> to vector<64x128xbf16>
    %c4 = arith.constant 4 : index
    %c0_32 = arith.constant 0 : index
    %c0_33 = arith.constant 0 : index
    %37 = vector.load %arg5[%c4, %c0_32, %c0_33] : memref<9x128x128xbf16, #tpu.memory_space<vmem>>, vector<1x128x128xbf16>
    %38 = vector.shape_cast %37 : vector<1x128x128xbf16> to vector<128x128xbf16>
    %cst_34 = arith.constant dense<0.000000e+00> : vector<64x128xf32>
    %39 = tpu.matmul %36, %38, %cst_34 {dimension_numbers = #tpu.dot_dimension_numbers<[1], [0], [0], [1], [0, 0, 1, 1], [], []>} : vector<64x128xbf16>, vector<128x128xbf16>, vector<64x128xf32> -> vector<64x128xf32>
    %40 = arith.addf %32, %39 : vector<64x128xf32>
    %c0_35 = arith.constant 0 : index
    %c0_36 = arith.constant 0 : index
    %c1_37 = arith.constant 1 : index
    %c0_38 = arith.constant 0 : index
    %41 = vector.load %arg3[%c0_35, %c0_36, %c1_37, %c0_38] : memref<1x9x9x128xf32, #tpu.memory_space<vmem>>, vector<1x8x8x128xf32>
    %42 = vector.shape_cast %41 : vector<1x8x8x128xf32> to vector<8x8x128xf32>
    %43 = vector.shape_cast %42 : vector<8x8x128xf32> to vector<64x128xf32>
    %44 = arith.truncf %43 : vector<64x128xf32> to vector<64x128xbf16>
    %c5 = arith.constant 5 : index
    %c0_39 = arith.constant 0 : index
    %c0_40 = arith.constant 0 : index
    %45 = vector.load %arg5[%c5, %c0_39, %c0_40] : memref<9x128x128xbf16, #tpu.memory_space<vmem>>, vector<1x128x128xbf16>
    %46 = vector.shape_cast %45 : vector<1x128x128xbf16> to vector<128x128xbf16>
    %cst_41 = arith.constant dense<0.000000e+00> : vector<64x128xf32>
    %47 = tpu.matmul %44, %46, %cst_41 {dimension_numbers = #tpu.dot_dimension_numbers<[1], [0], [0], [1], [0, 0, 1, 1], [], []>} : vector<64x128xbf16>, vector<128x128xbf16>, vector<64x128xf32> -> vector<64x128xf32>
    %48 = arith.addf %40, %47 : vector<64x128xf32>
    %c0_42 = arith.constant 0 : index
    %c1_43 = arith.constant 1 : index
    %c0_44 = arith.constant 0 : index
    %c0_45 = arith.constant 0 : index
    %49 = vector.load %arg1[%c0_42, %c1_43, %c0_44, %c0_45] : memref<1x9x9x128xf32, #tpu.memory_space<vmem>>, vector<1x8x8x128xf32>
    %50 = vector.shape_cast %49 : vector<1x8x8x128xf32> to vector<8x8x128xf32>
    %51 = vector.shape_cast %50 : vector<8x8x128xf32> to vector<64x128xf32>
    %52 = arith.truncf %51 : vector<64x128xf32> to vector<64x128xbf16>
    %c6 = arith.constant 6 : index
    %c0_46 = arith.constant 0 : index
    %c0_47 = arith.constant 0 : index
    %53 = vector.load %arg5[%c6, %c0_46, %c0_47] : memref<9x128x128xbf16, #tpu.memory_space<vmem>>, vector<1x128x128xbf16>
    %54 = vector.shape_cast %53 : vector<1x128x128xbf16> to vector<128x128xbf16>
    %cst_48 = arith.constant dense<0.000000e+00> : vector<64x128xf32>
    %55 = tpu.matmul %52, %54, %cst_48 {dimension_numbers = #tpu.dot_dimension_numbers<[1], [0], [0], [1], [0, 0, 1, 1], [], []>} : vector<64x128xbf16>, vector<128x128xbf16>, vector<64x128xf32> -> vector<64x128xf32>
    %56 = arith.addf %48, %55 : vector<64x128xf32>
    %c0_49 = arith.constant 0 : index
    %c1_50 = arith.constant 1 : index
    %c0_51 = arith.constant 0 : index
    %c0_52 = arith.constant 0 : index
    %57 = vector.load %arg2[%c0_49, %c1_50, %c0_51, %c0_52] : memref<1x9x9x128xf32, #tpu.memory_space<vmem>>, vector<1x8x8x128xf32>
    %58 = vector.shape_cast %57 : vector<1x8x8x128xf32> to vector<8x8x128xf32>
    %59 = vector.shape_cast %58 : vector<8x8x128xf32> to vector<64x128xf32>
    %60 = arith.truncf %59 : vector<64x128xf32> to vector<64x128xbf16>
    %c7 = arith.constant 7 : index
    %c0_53 = arith.constant 0 : index
    %c0_54 = arith.constant 0 : index
    %61 = vector.load %arg5[%c7, %c0_53, %c0_54] : memref<9x128x128xbf16, #tpu.memory_space<vmem>>, vector<1x128x128xbf16>
    %62 = vector.shape_cast %61 : vector<1x128x128xbf16> to vector<128x128xbf16>
    %cst_55 = arith.constant dense<0.000000e+00> : vector<64x128xf32>
    %63 = tpu.matmul %60, %62, %cst_55 {dimension_numbers = #tpu.dot_dimension_numbers<[1], [0], [0], [1], [0, 0, 1, 1], [], []>} : vector<64x128xbf16>, vector<128x128xbf16>, vector<64x128xf32> -> vector<64x128xf32>
    %64 = arith.addf %56, %63 : vector<64x128xf32>
    %c0_56 = arith.constant 0 : index
    %c1_57 = arith.constant 1 : index
    %c1_58 = arith.constant 1 : index
    %c0_59 = arith.constant 0 : index
    %65 = vector.load %arg1[%c0_56, %c1_57, %c1_58, %c0_59] : memref<1x9x9x128xf32, #tpu.memory_space<vmem>>, vector<1x8x8x128xf32>
    %66 = vector.shape_cast %65 : vector<1x8x8x128xf32> to vector<8x8x128xf32>
    %67 = vector.shape_cast %66 : vector<8x8x128xf32> to vector<64x128xf32>
    %68 = arith.truncf %67 : vector<64x128xf32> to vector<64x128xbf16>
    %c8 = arith.constant 8 : index
    %c0_60 = arith.constant 0 : index
    %c0_61 = arith.constant 0 : index
    %69 = vector.load %arg5[%c8, %c0_60, %c0_61] : memref<9x128x128xbf16, #tpu.memory_space<vmem>>, vector<1x128x128xbf16>
    %70 = vector.shape_cast %69 : vector<1x128x128xbf16> to vector<128x128xbf16>
    %cst_62 = arith.constant dense<0.000000e+00> : vector<64x128xf32>
    %71 = tpu.matmul %68, %70, %cst_62 {dimension_numbers = #tpu.dot_dimension_numbers<[1], [0], [0], [1], [0, 0, 1, 1], [], []>} : vector<64x128xbf16>, vector<128x128xbf16>, vector<64x128xf32> -> vector<64x128xf32>
    %72 = arith.addf %64, %71 : vector<64x128xf32>
    %c0_63 = arith.constant 0 : index
    %c0_64 = arith.constant 0 : index
    %73 = vector.load %arg6[%c0_63, %c0_64] : memref<1x128xf32, #tpu.memory_space<vmem>>, vector<1x128xf32>
    %74 = vector.broadcast %73 : vector<1x128xf32> to vector<64x128xf32>
    %75 = arith.addf %72, %74 : vector<64x128xf32>
    %cst_65 = arith.constant 0.000000e+00 : f32
    %76 = vector.broadcast %cst_65 : f32 to vector<64x128xf32>
    %77 = arith.maximumf %75, %76 : vector<64x128xf32>
    %cst_66 = arith.constant 0.000000e+00 : f32
    %78 = vector.broadcast %cst_66 : f32 to vector<10x10x128xf32>
    %c0_67 = arith.constant 0 : index
    %c0_68 = arith.constant 0 : index
    %c0_69 = arith.constant 0 : index
    %79 = vector.load %arg12[%c0_67, %c0_68, %c0_69] : memref<10x10x128xf32, #tpu.memory_space<vmem>>, vector<10x10x128xf32>
    tpu.vector_store %arg12[%c0_67, %c0_68, %c0_69], %78 {strides = array<i32>} : memref<10x10x128xf32, #tpu.memory_space<vmem>>, vector<10x10x128xf32>,
    %80 = vector.shape_cast %77 : vector<64x128xf32> to vector<8x8x128xf32>
    %c1_70 = arith.constant 1 : index
    %c1_71 = arith.constant 1 : index
    %c0_72 = arith.constant 0 : index
    %81 = vector.load %arg12[%c1_70, %c1_71, %c0_72] : memref<10x10x128xf32, #tpu.memory_space<vmem>>, vector<8x8x128xf32>
    tpu.vector_store %arg12[%c1_70, %c1_71, %c0_72], %80 {strides = array<i32>} : memref<10x10x128xf32, #tpu.memory_space<vmem>>, vector<8x8x128xf32>,
    %cst_73 = arith.constant 0.000000e+00 : f32
    %82 = vector.broadcast %cst_73 : f32 to vector<64x128xf32>
    %c0_74 = arith.constant 0 : index
    %c0_75 = arith.constant 0 : index
    %c0_76 = arith.constant 0 : index
    %83 = vector.load %arg12[%c0_74, %c0_75, %c0_76] : memref<10x10x128xf32, #tpu.memory_space<vmem>>, vector<8x8x128xf32>
    %84 = vector.shape_cast %83 : vector<8x8x128xf32> to vector<64x128xf32>
    %85 = arith.truncf %84 : vector<64x128xf32> to vector<64x128xbf16>
    %c0_77 = arith.constant 0 : index
    %c0_78 = arith.constant 0 : index
    %c0_79 = arith.constant 0 : index
    %86 = vector.load %arg7[%c0_77, %c0_78, %c0_79] : memref<9x128x128xbf16, #tpu.memory_space<vmem>>, vector<1x128x128xbf16>
    %87 = vector.shape_cast %86 : vector<1x128x128xbf16> to vector<128x128xbf16>
    %cst_80 = arith.constant dense<0.000000e+00> : vector<64x128xf32>
    %88 = tpu.matmul %85, %87, %cst_80 {dimension_numbers = #tpu.dot_dimension_numbers<[1], [0], [0], [1], [0, 0, 1, 1], [], []>} : vector<64x128xbf16>, vector<128x128xbf16>, vector<64x128xf32> -> vector<64x128xf32>
    %89 = arith.addf %82, %88 : vector<64x128xf32>
    %c0_81 = arith.constant 0 : index
    %c1_82 = arith.constant 1 : index
    %c0_83 = arith.constant 0 : index
    %90 = vector.load %arg12[%c0_81, %c1_82, %c0_83] : memref<10x10x128xf32, #tpu.memory_space<vmem>>, vector<8x8x128xf32>
    %91 = vector.shape_cast %90 : vector<8x8x128xf32> to vector<64x128xf32>
    %92 = arith.truncf %91 : vector<64x128xf32> to vector<64x128xbf16>
    %c1_84 = arith.constant 1 : index
    %c0_85 = arith.constant 0 : index
    %c0_86 = arith.constant 0 : index
    %93 = vector.load %arg7[%c1_84, %c0_85, %c0_86] : memref<9x128x128xbf16, #tpu.memory_space<vmem>>, vector<1x128x128xbf16>
    %94 = vector.shape_cast %93 : vector<1x128x128xbf16> to vector<128x128xbf16>
    %cst_87 = arith.constant dense<0.000000e+00> : vector<64x128xf32>
    %95 = tpu.matmul %92, %94, %cst_87 {dimension_numbers = #tpu.dot_dimension_numbers<[1], [0], [0], [1], [0, 0, 1, 1], [], []>} : vector<64x128xbf16>, vector<128x128xbf16>, vector<64x128xf32> -> vector<64x128xf32>
    %96 = arith.addf %89, %95 : vector<64x128xf32>
    %c0_88 = arith.constant 0 : index
    %c2_89 = arith.constant 2 : index
    %c0_90 = arith.constant 0 : index
    %97 = vector.load %arg12[%c0_88, %c2_89, %c0_90] : memref<10x10x128xf32, #tpu.memory_space<vmem>>, vector<8x8x128xf32>
    %98 = vector.shape_cast %97 : vector<8x8x128xf32> to vector<64x128xf32>
    %99 = arith.truncf %98 : vector<64x128xf32> to vector<64x128xbf16>
    %c2_91 = arith.constant 2 : index
    %c0_92 = arith.constant 0 : index
    %c0_93 = arith.constant 0 : index
    %100 = vector.load %arg7[%c2_91, %c0_92, %c0_93] : memref<9x128x128xbf16, #tpu.memory_space<vmem>>, vector<1x128x128xbf16>
    %101 = vector.shape_cast %100 : vector<1x128x128xbf16> to vector<128x128xbf16>
    %cst_94 = arith.constant dense<0.000000e+00> : vector<64x128xf32>
    %102 = tpu.matmul %99, %101, %cst_94 {dimension_numbers = #tpu.dot_dimension_numbers<[1], [0], [0], [1], [0, 0, 1, 1], [], []>} : vector<64x128xbf16>, vector<128x128xbf16>, vector<64x128xf32> -> vector<64x128xf32>
    %103 = arith.addf %96, %102 : vector<64x128xf32>
    %c1_95 = arith.constant 1 : index
    %c0_96 = arith.constant 0 : index
    %c0_97 = arith.constant 0 : index
    %104 = vector.load %arg12[%c1_95, %c0_96, %c0_97] : memref<10x10x128xf32, #tpu.memory_space<vmem>>, vector<8x8x128xf32>
    %105 = vector.shape_cast %104 : vector<8x8x128xf32> to vector<64x128xf32>
    %106 = arith.truncf %105 : vector<64x128xf32> to vector<64x128xbf16>
    %c3_98 = arith.constant 3 : index
    %c0_99 = arith.constant 0 : index
    %c0_100 = arith.constant 0 : index
    %107 = vector.load %arg7[%c3_98, %c0_99, %c0_100] : memref<9x128x128xbf16, #tpu.memory_space<vmem>>, vector<1x128x128xbf16>
    %108 = vector.shape_cast %107 : vector<1x128x128xbf16> to vector<128x128xbf16>
    %cst_101 = arith.constant dense<0.000000e+00> : vector<64x128xf32>
    %109 = tpu.matmul %106, %108, %cst_101 {dimension_numbers = #tpu.dot_dimension_numbers<[1], [0], [0], [1], [0, 0, 1, 1], [], []>} : vector<64x128xbf16>, vector<128x128xbf16>, vector<64x128xf32> -> vector<64x128xf32>
    %110 = arith.addf %103, %109 : vector<64x128xf32>
    %c1_102 = arith.constant 1 : index
    %c1_103 = arith.constant 1 : index
    %c0_104 = arith.constant 0 : index
    %111 = vector.load %arg12[%c1_102, %c1_103, %c0_104] : memref<10x10x128xf32, #tpu.memory_space<vmem>>, vector<8x8x128xf32>
    %112 = vector.shape_cast %111 : vector<8x8x128xf32> to vector<64x128xf32>
    %113 = arith.truncf %112 : vector<64x128xf32> to vector<64x128xbf16>
    %c4_105 = arith.constant 4 : index
    %c0_106 = arith.constant 0 : index
    %c0_107 = arith.constant 0 : index
    %114 = vector.load %arg7[%c4_105, %c0_106, %c0_107] : memref<9x128x128xbf16, #tpu.memory_space<vmem>>, vector<1x128x128xbf16>
    %115 = vector.shape_cast %114 : vector<1x128x128xbf16> to vector<128x128xbf16>
    %cst_108 = arith.constant dense<0.000000e+00> : vector<64x128xf32>
    %116 = tpu.matmul %113, %115, %cst_108 {dimension_numbers = #tpu.dot_dimension_numbers<[1], [0], [0], [1], [0, 0, 1, 1], [], []>} : vector<64x128xbf16>, vector<128x128xbf16>, vector<64x128xf32> -> vector<64x128xf32>
    %117 = arith.addf %110, %116 : vector<64x128xf32>
    %c1_109 = arith.constant 1 : index
    %c2_110 = arith.constant 2 : index
    %c0_111 = arith.constant 0 : index
    %118 = vector.load %arg12[%c1_109, %c2_110, %c0_111] : memref<10x10x128xf32, #tpu.memory_space<vmem>>, vector<8x8x128xf32>
    %119 = vector.shape_cast %118 : vector<8x8x128xf32> to vector<64x128xf32>
    %120 = arith.truncf %119 : vector<64x128xf32> to vector<64x128xbf16>
    %c5_112 = arith.constant 5 : index
    %c0_113 = arith.constant 0 : index
    %c0_114 = arith.constant 0 : index
    %121 = vector.load %arg7[%c5_112, %c0_113, %c0_114] : memref<9x128x128xbf16, #tpu.memory_space<vmem>>, vector<1x128x128xbf16>
    %122 = vector.shape_cast %121 : vector<1x128x128xbf16> to vector<128x128xbf16>
    %cst_115 = arith.constant dense<0.000000e+00> : vector<64x128xf32>
    %123 = tpu.matmul %120, %122, %cst_115 {dimension_numbers = #tpu.dot_dimension_numbers<[1], [0], [0], [1], [0, 0, 1, 1], [], []>} : vector<64x128xbf16>, vector<128x128xbf16>, vector<64x128xf32> -> vector<64x128xf32>
    %124 = arith.addf %117, %123 : vector<64x128xf32>
    %c2_116 = arith.constant 2 : index
    %c0_117 = arith.constant 0 : index
    %c0_118 = arith.constant 0 : index
    %125 = vector.load %arg12[%c2_116, %c0_117, %c0_118] : memref<10x10x128xf32, #tpu.memory_space<vmem>>, vector<8x8x128xf32>
    %126 = vector.shape_cast %125 : vector<8x8x128xf32> to vector<64x128xf32>
    %127 = arith.truncf %126 : vector<64x128xf32> to vector<64x128xbf16>
    %c6_119 = arith.constant 6 : index
    %c0_120 = arith.constant 0 : index
    %c0_121 = arith.constant 0 : index
    %128 = vector.load %arg7[%c6_119, %c0_120, %c0_121] : memref<9x128x128xbf16, #tpu.memory_space<vmem>>, vector<1x128x128xbf16>
    %129 = vector.shape_cast %128 : vector<1x128x128xbf16> to vector<128x128xbf16>
    %cst_122 = arith.constant dense<0.000000e+00> : vector<64x128xf32>
    %130 = tpu.matmul %127, %129, %cst_122 {dimension_numbers = #tpu.dot_dimension_numbers<[1], [0], [0], [1], [0, 0, 1, 1], [], []>} : vector<64x128xbf16>, vector<128x128xbf16>, vector<64x128xf32> -> vector<64x128xf32>
    %131 = arith.addf %124, %130 : vector<64x128xf32>
    %c2_123 = arith.constant 2 : index
    %c1_124 = arith.constant 1 : index
    %c0_125 = arith.constant 0 : index
    %132 = vector.load %arg12[%c2_123, %c1_124, %c0_125] : memref<10x10x128xf32, #tpu.memory_space<vmem>>, vector<8x8x128xf32>
    %133 = vector.shape_cast %132 : vector<8x8x128xf32> to vector<64x128xf32>
    %134 = arith.truncf %133 : vector<64x128xf32> to vector<64x128xbf16>
    %c7_126 = arith.constant 7 : index
    %c0_127 = arith.constant 0 : index
    %c0_128 = arith.constant 0 : index
    %135 = vector.load %arg7[%c7_126, %c0_127, %c0_128] : memref<9x128x128xbf16, #tpu.memory_space<vmem>>, vector<1x128x128xbf16>
    %136 = vector.shape_cast %135 : vector<1x128x128xbf16> to vector<128x128xbf16>
    %cst_129 = arith.constant dense<0.000000e+00> : vector<64x128xf32>
    %137 = tpu.matmul %134, %136, %cst_129 {dimension_numbers = #tpu.dot_dimension_numbers<[1], [0], [0], [1], [0, 0, 1, 1], [], []>} : vector<64x128xbf16>, vector<128x128xbf16>, vector<64x128xf32> -> vector<64x128xf32>
    %138 = arith.addf %131, %137 : vector<64x128xf32>
    %c2_130 = arith.constant 2 : index
    %c2_131 = arith.constant 2 : index
    %c0_132 = arith.constant 0 : index
    %139 = vector.load %arg12[%c2_130, %c2_131, %c0_132] : memref<10x10x128xf32, #tpu.memory_space<vmem>>, vector<8x8x128xf32>
    %140 = vector.shape_cast %139 : vector<8x8x128xf32> to vector<64x128xf32>
    %141 = arith.truncf %140 : vector<64x128xf32> to vector<64x128xbf16>
    %c8_133 = arith.constant 8 : index
    %c0_134 = arith.constant 0 : index
    %c0_135 = arith.constant 0 : index
    %142 = vector.load %arg7[%c8_133, %c0_134, %c0_135] : memref<9x128x128xbf16, #tpu.memory_space<vmem>>, vector<1x128x128xbf16>
    %143 = vector.shape_cast %142 : vector<1x128x128xbf16> to vector<128x128xbf16>
    %cst_136 = arith.constant dense<0.000000e+00> : vector<64x128xf32>
    %144 = tpu.matmul %141, %143, %cst_136 {dimension_numbers = #tpu.dot_dimension_numbers<[1], [0], [0], [1], [0, 0, 1, 1], [], []>} : vector<64x128xbf16>, vector<128x128xbf16>, vector<64x128xf32> -> vector<64x128xf32>
    %145 = arith.addf %138, %144 : vector<64x128xf32>
    %c0_137 = arith.constant 0 : index
    %c0_138 = arith.constant 0 : index
    %146 = vector.load %arg8[%c0_137, %c0_138] : memref<1x128xf32, #tpu.memory_space<vmem>>, vector<1x128xf32>
    %147 = vector.broadcast %146 : vector<1x128xf32> to vector<64x128xf32>
    %148 = arith.addf %145, %147 : vector<64x128xf32>
    %c0_139 = arith.constant 0 : index
    %c0_140 = arith.constant 0 : index
    %c0_141 = arith.constant 0 : index
    %c0_142 = arith.constant 0 : index
    %149 = vector.load %arg4[%c0_139, %c0_140, %c0_141, %c0_142] : memref<1x9x9x128xf32, #tpu.memory_space<vmem>>, vector<1x8x8x128xf32>
    %150 = vector.shape_cast %149 : vector<1x8x8x128xf32> to vector<8x8x128xf32>
    %151 = vector.shape_cast %150 : vector<8x8x128xf32> to vector<64x128xf32>
    %152 = arith.truncf %151 : vector<64x128xf32> to vector<64x128xbf16>
    %c0_143 = arith.constant 0 : index
    %c0_144 = arith.constant 0 : index
    %c0_145 = arith.constant 0 : index
    %153 = vector.load %arg9[%c0_143, %c0_144, %c0_145] : memref<1x128x128xbf16, #tpu.memory_space<vmem>>, vector<1x128x128xbf16>
    %154 = vector.shape_cast %153 : vector<1x128x128xbf16> to vector<128x128xbf16>
    %cst_146 = arith.constant dense<0.000000e+00> : vector<64x128xf32>
    %155 = tpu.matmul %152, %154, %cst_146 {dimension_numbers = #tpu.dot_dimension_numbers<[1], [0], [0], [1], [0, 0, 1, 1], [], []>} : vector<64x128xbf16>, vector<128x128xbf16>, vector<64x128xf32> -> vector<64x128xf32>
    %c0_147 = arith.constant 0 : index
    %c0_148 = arith.constant 0 : index
    %156 = vector.load %arg10[%c0_147, %c0_148] : memref<1x128xf32, #tpu.memory_space<vmem>>, vector<1x128xf32>
    %157 = vector.broadcast %156 : vector<1x128xf32> to vector<64x128xf32>
    %158 = arith.addf %155, %157 : vector<64x128xf32>
    %159 = arith.addf %148, %158 : vector<64x128xf32>
    %cst_149 = arith.constant 0.000000e+00 : f32
    %160 = vector.broadcast %cst_149 : f32 to vector<64x128xf32>
    %161 = arith.maximumf %159, %160 : vector<64x128xf32>
    %c0_150 = arith.constant 0 : index
    %c0_151 = arith.constant 0 : index
    %c0_152 = arith.constant 0 : index
    %162 = vector.load %arg11[%c0_150, %c0_151, %c0_152] : memref<1x64x128xf32, #tpu.memory_space<vmem>>, vector<1x64x128xf32>
    %163 = vector.shape_cast %162 : vector<1x64x128xf32> to vector<64x128xf32>
    %164 = vector.shape_cast %161 : vector<64x128xf32> to vector<1x64x128xf32>
    tpu.vector_store %arg11[%c0_150, %c0_151, %c0_152], %164 {strides = array<i32>} : memref<1x64x128xf32, #tpu.memory_space<vmem>>, vector<1x64x128xf32>,
    return
  }
  func.func @transform_0(%arg0: i32) -> (i32, i32, i32, i32) {
    %c0_i32 = arith.constant 0 : i32
    %c0_i32_0 = arith.constant 0 : i32
    %c0_i32_1 = arith.constant 0 : i32
    %c0_i32_2 = arith.constant 0 : i32
    return %arg0, %c0_i32, %c0_i32_0, %c0_i32_1 : i32, i32, i32, i32
  }
  func.func @transform_1(%arg0: i32) -> (i32, i32, i32, i32) {
    %c0_i32 = arith.constant 0 : i32
    %c0_i32_0 = arith.constant 0 : i32
    %c0_i32_1 = arith.constant 0 : i32
    %c0_i32_2 = arith.constant 0 : i32
    return %arg0, %c0_i32, %c0_i32_0, %c0_i32_1 : i32, i32, i32, i32
  }
  func.func @transform_2(%arg0: i32) -> (i32, i32, i32, i32) {
    %c0_i32 = arith.constant 0 : i32
    %c0_i32_0 = arith.constant 0 : i32
    %c0_i32_1 = arith.constant 0 : i32
    %c0_i32_2 = arith.constant 0 : i32
    return %arg0, %c0_i32, %c0_i32_0, %c0_i32_1 : i32, i32, i32, i32
  }
  func.func @transform_3(%arg0: i32) -> (i32, i32, i32, i32) {
    %c0_i32 = arith.constant 0 : i32
    %c0_i32_0 = arith.constant 0 : i32
    %c0_i32_1 = arith.constant 0 : i32
    %c0_i32_2 = arith.constant 0 : i32
    return %arg0, %c0_i32, %c0_i32_0, %c0_i32_1 : i32, i32, i32, i32
  }
  func.func @transform_4(%arg0: i32) -> (i32, i32, i32) {
    %c0_i32 = arith.constant 0 : i32
    %c0_i32_0 = arith.constant 0 : i32
    %c0_i32_1 = arith.constant 0 : i32
    %c0_i32_2 = arith.constant 0 : i32
    return %c0_i32, %c0_i32_0, %c0_i32_1 : i32, i32, i32
  }
  func.func @transform_5(%arg0: i32) -> (i32, i32) {
    %c0_i32 = arith.constant 0 : i32
    %c0_i32_0 = arith.constant 0 : i32
    %c0_i32_1 = arith.constant 0 : i32
    return %c0_i32, %c0_i32_0 : i32, i32
  }
  func.func @transform_6(%arg0: i32) -> (i32, i32, i32) {
    %c0_i32 = arith.constant 0 : i32
    %c0_i32_0 = arith.constant 0 : i32
    %c0_i32_1 = arith.constant 0 : i32
    %c0_i32_2 = arith.constant 0 : i32
    return %c0_i32, %c0_i32_0, %c0_i32_1 : i32, i32, i32
  }
  func.func @transform_7(%arg0: i32) -> (i32, i32) {
    %c0_i32 = arith.constant 0 : i32
    %c0_i32_0 = arith.constant 0 : i32
    %c0_i32_1 = arith.constant 0 : i32
    return %c0_i32, %c0_i32_0 : i32, i32
  }
  func.func @transform_8(%arg0: i32) -> (i32, i32, i32) {
    %c0_i32 = arith.constant 0 : i32
    %c0_i32_0 = arith.constant 0 : i32
    %c0_i32_1 = arith.constant 0 : i32
    %c0_i32_2 = arith.constant 0 : i32
    return %c0_i32, %c0_i32_0, %c0_i32_1 : i32, i32, i32
  }
  func.func @transform_9(%arg0: i32) -> (i32, i32) {
    %c0_i32 = arith.constant 0 : i32
    %c0_i32_0 = arith.constant 0 : i32
    %c0_i32_1 = arith.constant 0 : i32
    return %c0_i32, %c0_i32_0 : i32, i32
  }
  func.func @transform_10(%arg0: i32) -> (i32, i32, i32) {
    %c0_i32 = arith.constant 0 : i32
    %c0_i32_0 = arith.constant 0 : i32
    %c0_i32_1 = arith.constant 0 : i32
    return %arg0, %c0_i32, %c0_i32_0 : i32, i32, i32
  }
}

</mosaic_0001>

<llo_original>
// kernel: basic_block_forward.1
$region0: #{basic_block_forward.1}
  #allocation0 [shape = 'u32[]', space=smem, size = 0x4, offset = 0x4, fixed_abs, tag = 'smem constant byte address 0x4 - core index']
  #allocation1 [shape = 'u32[72,128]{1,0:T(1,128)}', space=vmem, size = 0x9000, scoped, tag = 'internal scratch']
  #allocation2 [shape = 'f32[10,10,128]{2,1,0:T(8,128)}', space=vmem, size = 0x14000, scoped, tag = 'scratch operand']
  %s0 = inlined_call_operand.vmem [shape: f32[2,9,9,128], index: 0, kind: input, shape index: {}]
  %s1 = inlined_call_operand.vmem [shape: f32[2,9,9,128], index: 1, kind: input, shape index: {}]
  %s2 = inlined_call_operand.vmem [shape: f32[2,9,9,128], index: 2, kind: input, shape index: {}]
  %s3 = inlined_call_operand.vmem [shape: f32[2,9,9,128], index: 3, kind: input, shape index: {}]
  %s4 = inlined_call_operand.vmem [shape: bf16[9,128,128], index: 4, kind: input, shape index: {}]
  %s5 = inlined_call_operand.vmem [shape: f32[1,128], index: 5, kind: input, shape index: {}]
  %s6 = inlined_call_operand.vmem [shape: bf16[9,128,128], index: 6, kind: input, shape index: {}]
  %s7 = inlined_call_operand.vmem [shape: f32[1,128], index: 7, kind: input, shape index: {}]
  %s8 = inlined_call_operand.vmem [shape: bf16[1,128,128], index: 8, kind: input, shape index: {}]
  %s9 = inlined_call_operand.vmem [shape: f32[1,128], index: 9, kind: input, shape index: {}]
  %s10 = inlined_call_operand.vmem [shape: f32[2,64,128], index: 10, kind: output, shape index: {}]
  %s11 = sld [smem:[#allocation0]]
  $region73: #{basic_block_forward.1} parent=0
    _
  %s13 = ssub.s32 1, %s11
  %s14 = scalar_select 0, %s13, %s11
  loop: start=0, step=1, limit=4
  $region2: #{basic_block_forward.1} parent=0 // loop_pre_header
    _
  $region3: #{basic_block_forward.1} parent=0 // loop_header
    %s16 = sphi 0, %s20
    %p17 = scmp.ge.s32.totalorder %s16, 4
    %s26 = sphi 0, %s28
    %s29 = sphi 0, %s26
    %s30 = sphi 0, %s29
    %s46 = sphi 0, %s30
    %s52 = sphi 0, %s54
    %s55 = sphi 0, %s52
    %s56 = sphi 0, %s55
    %s72 = sphi 0, %s56
    %s78 = sphi 0, %s80
    %s81 = sphi 0, %s78
    %s82 = sphi 0, %s81
    %s98 = sphi 0, %s82
    %s104 = sphi 0, %s106
    %s107 = sphi 0, %s104
    %s108 = sphi 0, %s107
    %s124 = sphi 0, %s108
    %s128 = sphi 0, %s128
    %s130 = sphi 0, %s128
    %s131 = sphi 0, %s130
    %s145 = sphi 0, %s131
    %s149 = sphi 0, %s149
    %s151 = sphi 0, %s149
    %s152 = sphi 0, %s151
    %s166 = sphi 0, %s152
    %s170 = sphi 0, %s170
    %s172 = sphi 0, %s170
    %s173 = sphi 0, %s172
    %s187 = sphi 0, %s173
    %s191 = sphi 0, %s191
    %s193 = sphi 0, %s191
    %s194 = sphi 0, %s193
    %s208 = sphi 0, %s194
    %s212 = sphi 0, %s212
    %s214 = sphi 0, %s212
    %s215 = sphi 0, %s214
    %s229 = sphi 0, %s215
    %s233 = sphi 0, %s233
    %s235 = sphi 0, %s233
    %s236 = sphi 0, %s235
    %s250 = sphi 0, %s236
    %s256 = sphi 0, %s258
    %s259 = sphi 0, %s256
    %s260 = sphi 0, %s259
    %s276 = sphi 0, %s260
  $region4: #{basic_block_forward.1} parent=0 // loop_header_branch
    %19 = sbr.rel (%p17) target = $region8
  $region5: #{basic_block_forward.1} parent=0 // loop_body
    %s21 = ssub.s32 %s16, 1
    %s22 = ssub.s32 %s16, 2
    %s23 = sadd.s32 %s16, 1
    %s24 = ssub.s32 %s16, %s23
    %p25 = scmp.eq.s32.totalorder %s24, 0
    %s27 = sadd.s32 %s26, 1
    %s28 = scalar_select %p25, %s26, %s27
    %p31 = pneg %p25
    %p32 = scmp.eq.s32.totalorder %s16, 1
    %p33 = por %p31, %p32
    %p34 = scmp.ne.s32.totalorder %s26, %s29
    %p35 = scmp.eq.s32.totalorder %s16, 0
    %p36 = por %p34, %p35
    %p37 = scmp.ne.s32.totalorder %s26, %s29
    %p38 = scmp.eq.s32.totalorder %s21, 1
    %p39 = por %p37, %p38
    %p40 = scmp.ne.s32.totalorder %s29, %s30
    %p41 = scmp.eq.s32.totalorder %s21, 0
    %p42 = por %p40, %p41
    %p43 = scmp.ne.s32.totalorder %s29, %s30
    %p44 = scmp.eq.s32.totalorder %s22, 1
    %p45 = por %p43, %p44
    %p47 = scmp.ne.s32.totalorder %s30, %s46
    %p48 = scmp.eq.s32.totalorder %s22, 0
    %p49 = por %p47, %p48
    %s50 = ssub.s32 %s16, %s23
    %p51 = scmp.eq.s32.totalorder %s50, 0
    %s53 = sadd.s32 %s52, 1
    %s54 = scalar_select %p51, %s52, %s53
    %p57 = pneg %p51
    %p58 = scmp.eq.s32.totalorder %s16, 1
    %p59 = por %p57, %p58
    %p60 = scmp.ne.s32.totalorder %s52, %s55
    %p61 = scmp.eq.s32.totalorder %s16, 0
    %p62 = por %p60, %p61
    %p63 = scmp.ne.s32.totalorder %s52, %s55
    %p64 = scmp.eq.s32.totalorder %s21, 1
    %p65 = por %p63, %p64
    %p66 = scmp.ne.s32.totalorder %s55, %s56
    %p67 = scmp.eq.s32.totalorder %s21, 0
    %p68 = por %p66, %p67
    %p69 = scmp.ne.s32.totalorder %s55, %s56
    %p70 = scmp.eq.s32.totalorder %s22, 1
    %p71 = por %p69, %p70
    %p73 = scmp.ne.s32.totalorder %s56, %s72
    %p74 = scmp.eq.s32.totalorder %s22, 0
    %p75 = por %p73, %p74
    %s76 = ssub.s32 %s16, %s23
    %p77 = scmp.eq.s32.totalorder %s76, 0
    %s79 = sadd.s32 %s78, 1
    %s80 = scalar_select %p77, %s78, %s79
    %p83 = pneg %p77
    %p84 = scmp.eq.s32.totalorder %s16, 1
    %p85 = por %p83, %p84
    %p86 = scmp.ne.s32.totalorder %s78, %s81
    %p87 = scmp.eq.s32.totalorder %s16, 0
    %p88 = por %p86, %p87
    %p89 = scmp.ne.s32.totalorder %s78, %s81
    %p90 = scmp.eq.s32.totalorder %s21, 1
    %p91 = por %p89, %p90
    %p92 = scmp.ne.s32.totalorder %s81, %s82
    %p93 = scmp.eq.s32.totalorder %s21, 0
    %p94 = por %p92, %p93
    %p95 = scmp.ne.s32.totalorder %s81, %s82
    %p96 = scmp.eq.s32.totalorder %s22, 1
    %p97 = por %p95, %p96
    %p99 = scmp.ne.s32.totalorder %s82, %s98
    %p100 = scmp.eq.s32.totalorder %s22, 0
    %p101 = por %p99, %p100
    %s102 = ssub.s32 %s16, %s23
    %p103 = scmp.eq.s32.totalorder %s102, 0
    %s105 = sadd.s32 %s104, 1
    %s106 = scalar_select %p103, %s104, %s105
    %p109 = pneg %p103
    %p110 = scmp.eq.s32.totalorder %s16, 1
    %p111 = por %p109, %p110
    %p112 = scmp.ne.s32.totalorder %s104, %s107
    %p113 = scmp.eq.s32.totalorder %s16, 0
    %p114 = por %p112, %p113
    %p115 = scmp.ne.s32.totalorder %s104, %s107
    %p116 = scmp.eq.s32.totalorder %s21, 1
    %p117 = por %p115, %p116
    %p118 = scmp.ne.s32.totalorder %s107, %s108
    %p119 = scmp.eq.s32.totalorder %s21, 0
    %p120 = por %p118, %p119
    %p121 = scmp.ne.s32.totalorder %s107, %s108
    %p122 = scmp.eq.s32.totalorder %s22, 1
    %p123 = por %p121, %p122
    %p125 = scmp.ne.s32.totalorder %s108, %s124
    %p126 = scmp.eq.s32.totalorder %s22, 0
    %p127 = por %p125, %p126
    %s129 = sadd.s32 %s128, 1
    %p132 = scmp.eq.s32.totalorder %s16, 1
    %p133 = scmp.ne.s32.totalorder %s128, %s130
    %p134 = scmp.eq.s32.totalorder %s16, 0
    %p135 = por %p133, %p134
    %p136 = scmp.ne.s32.totalorder %s128, %s130
    %p137 = scmp.eq.s32.totalorder %s21, 1
    %p138 = por %p136, %p137
    %p139 = scmp.ne.s32.totalorder %s130, %s131
    %p140 = scmp.eq.s32.totalorder %s21, 0
    %p141 = por %p139, %p140
    %p142 = scmp.ne.s32.totalorder %s130, %s131
    %p143 = scmp.eq.s32.totalorder %s22, 1
    %p144 = por %p142, %p143
    %p146 = scmp.ne.s32.totalorder %s131, %s145
    %p147 = scmp.eq.s32.totalorder %s22, 0
    %p148 = por %p146, %p147
    %s150 = sadd.s32 %s149, 1
    %p153 = scmp.eq.s32.totalorder %s16, 1
    %p154 = scmp.ne.s32.totalorder %s149, %s151
    %p155 = scmp.eq.s32.totalorder %s16, 0
    %p156 = por %p154, %p155
    %p157 = scmp.ne.s32.totalorder %s149, %s151
    %p158 = scmp.eq.s32.totalorder %s21, 1
    %p159 = por %p157, %p158
    %p160 = scmp.ne.s32.totalorder %s151, %s152
    %p161 = scmp.eq.s32.totalorder %s21, 0
    %p162 = por %p160, %p161
    %p163 = scmp.ne.s32.totalorder %s151, %s152
    %p164 = scmp.eq.s32.totalorder %s22, 1
    %p165 = por %p163, %p164
    %p167 = scmp.ne.s32.totalorder %s152, %s166
    %p168 = scmp.eq.s32.totalorder %s22, 0
    %p169 = por %p167, %p168
    %s171 = sadd.s32 %s170, 1
    %p174 = scmp.eq.s32.totalorder %s16, 1
    %p175 = scmp.ne.s32.totalorder %s170, %s172
    %p176 = scmp.eq.s32.totalorder %s16, 0
    %p177 = por %p175, %p176
    %p178 = scmp.ne.s32.totalorder %s170, %s172
    %p179 = scmp.eq.s32.totalorder %s21, 1
    %p180 = por %p178, %p179
    %p181 = scmp.ne.s32.totalorder %s172, %s173
    %p182 = scmp.eq.s32.totalorder %s21, 0
    %p183 = por %p181, %p182
    %p184 = scmp.ne.s32.totalorder %s172, %s173
    %p185 = scmp.eq.s32.totalorder %s22, 1
    %p186 = por %p184, %p185
    %p188 = scmp.ne.s32.totalorder %s173, %s187
    %p189 = scmp.eq.s32.totalorder %s22, 0
    %p190 = por %p188, %p189
    %s192 = sadd.s32 %s191, 1
    %p195 = scmp.eq.s32.totalorder %s16, 1
    %p196 = scmp.ne.s32.totalorder %s191, %s193
    %p197 = scmp.eq.s32.totalorder %s16, 0
    %p198 = por %p196, %p197
    %p199 = scmp.ne.s32.totalorder %s191, %s193
    %p200 = scmp.eq.s32.totalorder %s21, 1
    %p201 = por %p199, %p200
    %p202 = scmp.ne.s32.totalorder %s193, %s194
    %p203 = scmp.eq.s32.totalorder %s21, 0
    %p204 = por %p202, %p203
    %p205 = scmp.ne.s32.totalorder %s193, %s194
    %p206 = scmp.eq.s32.totalorder %s22, 1
    %p207 = por %p205, %p206
    %p209 = scmp.ne.s32.totalorder %s194, %s208
    %p210 = scmp.eq.s32.totalorder %s22, 0
    %p211 = por %p209, %p210
    %s213 = sadd.s32 %s212, 1
    %p216 = scmp.eq.s32.totalorder %s16, 1
    %p217 = scmp.ne.s32.totalorder %s212, %s214
    %p218 = scmp.eq.s32.totalorder %s16, 0
    %p219 = por %p217, %p218
    %p220 = scmp.ne.s32.totalorder %s212, %s214
    %p221 = scmp.eq.s32.totalorder %s21, 1
    %p222 = por %p220, %p221
    %p223 = scmp.ne.s32.totalorder %s214, %s215
    %p224 = scmp.eq.s32.totalorder %s21, 0
    %p225 = por %p223, %p224
    %p226 = scmp.ne.s32.totalorder %s214, %s215
    %p227 = scmp.eq.s32.totalorder %s22, 1
    %p228 = por %p226, %p227
    %p230 = scmp.ne.s32.totalorder %s215, %s229
    %p231 = scmp.eq.s32.totalorder %s22, 0
    %p232 = por %p230, %p231
    %s234 = sadd.s32 %s233, 1
    %p237 = scmp.eq.s32.totalorder %s16, 1
    %p238 = scmp.ne.s32.totalorder %s233, %s235
    %p239 = scmp.eq.s32.totalorder %s16, 0
    %p240 = por %p238, %p239
    %p241 = scmp.ne.s32.totalorder %s233, %s235
    %p242 = scmp.eq.s32.totalorder %s21, 1
    %p243 = por %p241, %p242
    %p244 = scmp.ne.s32.totalorder %s235, %s236
    %p245 = scmp.eq.s32.totalorder %s21, 0
    %p246 = por %p244, %p245
    %p247 = scmp.ne.s32.totalorder %s235, %s236
    %p248 = scmp.eq.s32.totalorder %s22, 1
    %p249 = por %p247, %p248
    %p251 = scmp.ne.s32.totalorder %s236, %s250
    %p252 = scmp.eq.s32.totalorder %s22, 0
    %p253 = por %p251, %p252
    %s254 = ssub.s32 %s16, %s23
    %p255 = scmp.eq.s32.totalorder %s254, 0
    %s257 = sadd.s32 %s256, 1
    %s258 = scalar_select %p255, %s256, %s257
    %p261 = pneg %p255
    %p262 = scmp.eq.s32.totalorder %s16, 1
    %p263 = por %p261, %p262
    %p264 = scmp.ne.s32.totalorder %s256, %s259
    %p265 = scmp.eq.s32.totalorder %s16, 0
    %p266 = por %p264, %p265
    %p267 = scmp.ne.s32.totalorder %s256, %s259
    %p268 = scmp.eq.s32.totalorder %s21, 1
    %p269 = por %p267, %p268
    %p270 = scmp.ne.s32.totalorder %s259, %s260
    %p271 = scmp.eq.s32.totalorder %s21, 0
    %p272 = por %p270, %p271
    %p273 = scmp.ne.s32.totalorder %s259, %s260
    %p274 = scmp.eq.s32.totalorder %s22, 1
    %p275 = por %p273, %p274
    %p277 = scmp.ne.s32.totalorder %s260, %s276
    %p278 = scmp.eq.s32.totalorder %s22, 0
    %p279 = por %p277, %p278
    %p280 = scmp.le.s32.totalorder 1, %s16
    %p281 = scmp.lt.s32.totalorder %s16, 3
    %p282 = pnand %p280, %p281
    %p283 = pneg %p282
    // Predicated region
    $region9: #{basic_block_forward.1} parent=5 // pred_check
      _
    $region10: #{basic_block_forward.1} parent=5 // pred_check_branch
      %285 = sbr.rel (%p282) target = $region12
    $region11: #{basic_block_forward.1} parent=5 // pred_region
      %s286 = ssub.s32 %s16, 1
      // Predicated region
      $region13: #{basic_block_forward.1} parent=11 // pred_check
        %p287 = pneg %p141
      $region14: #{basic_block_forward.1} parent=11 // pred_check_branch
        %289 = sbr.rel (%p287) target = $region16
      $region15: #{basic_block_forward.1} parent=11 // pred_region
        _
      $region16: #{basic_block_forward.1} parent=11 // pred_fallthru
        _
      // Predicated region
      $region17: #{basic_block_forward.1} parent=11 // pred_check
        %p290 = pneg %p162
      $region18: #{basic_block_forward.1} parent=11 // pred_check_branch
        %292 = sbr.rel (%p290) target = $region20
      $region19: #{basic_block_forward.1} parent=11 // pred_region
        _
      $region20: #{basic_block_forward.1} parent=11 // pred_fallthru
        _
      // Predicated region
      $region21: #{basic_block_forward.1} parent=11 // pred_check
        %p293 = pneg %p183
      $region22: #{basic_block_forward.1} parent=11 // pred_check_branch
        %295 = sbr.rel (%p293) target = $region24
      $region23: #{basic_block_forward.1} parent=11 // pred_region
        _
      $region24: #{basic_block_forward.1} parent=11 // pred_fallthru
        _
      // Predicated region
      $region25: #{basic_block_forward.1} parent=11 // pred_check
        %p296 = pneg %p204
      $region26: #{basic_block_forward.1} parent=11 // pred_check_branch
        %298 = sbr.rel (%p296) target = $region28
      $region27: #{basic_block_forward.1} parent=11 // pred_region
        _
      $region28: #{basic_block_forward.1} parent=11 // pred_fallthru
        _
      // Predicated region
      $region29: #{basic_block_forward.1} parent=11 // pred_check
        %p299 = pneg %p225
      $region30: #{basic_block_forward.1} parent=11 // pred_check_branch
        %301 = sbr.rel (%p299) target = $region32
      $region31: #{basic_block_forward.1} parent=11 // pred_region
        _
      $region32: #{basic_block_forward.1} parent=11 // pred_fallthru
        _
      // Predicated region
      $region33: #{basic_block_forward.1} parent=11 // pred_check
        %p302 = pneg %p246
      $region34: #{basic_block_forward.1} parent=11 // pred_check_branch
        %304 = sbr.rel (%p302) target = $region36
      $region35: #{basic_block_forward.1} parent=11 // pred_region
        _
      $region36: #{basic_block_forward.1} parent=11 // pred_fallthru
        _
    $region12: #{basic_block_forward.1} parent=5 // pred_fallthru
      _
    %p305 = scmp.lt.s32.totalorder %s16, 2
    // Predicated region
    $region37: #{basic_block_forward.1} parent=5 // pred_check
      %p306 = pneg %p305
    $region38: #{basic_block_forward.1} parent=5 // pred_check_branch
      %308 = sbr.rel (%p306) target = $region40
    $region39: #{basic_block_forward.1} parent=5 // pred_region
      // Predicated region
      $region41: #{basic_block_forward.1} parent=39 // pred_check
        %p309 = pneg %p36
      $region42: #{basic_block_forward.1} parent=39 // pred_check_branch
        %311 = sbr.rel (%p309) target = $region44
      $region43: #{basic_block_forward.1} parent=39 // pred_region
        %p312 = scmp.lt.s32.totalorder %s16, 1
        %s313 = scalar_select %p312, %s16, 1
        %s314 = smul.addr %s313, 18
        %s315 = smul.addr %s314, 8
        %s316 = scalar_lea.vmem %s0, %s315
      $region44: #{basic_block_forward.1} parent=39 // pred_fallthru
        _
      // Predicated region
      $region45: #{basic_block_forward.1} parent=39 // pred_check
        %p317 = pneg %p62
      $region46: #{basic_block_forward.1} parent=39 // pred_check_branch
        %319 = sbr.rel (%p317) target = $region48
      $region47: #{basic_block_forward.1} parent=39 // pred_region
        %p320 = scmp.lt.s32.totalorder %s16, 1
        %s321 = scalar_select %p320, %s16, 1
        %s322 = smul.addr %s321, 18
        %s323 = smul.addr %s322, 8
        %s324 = scalar_lea.vmem %s1, %s323
      $region48: #{basic_block_forward.1} parent=39 // pred_fallthru
        _
      // Predicated region
      $region49: #{basic_block_forward.1} parent=39 // pred_check
        %p325 = pneg %p88
      $region50: #{basic_block_forward.1} parent=39 // pred_check_branch
        %327 = sbr.rel (%p325) target = $region52
      $region51: #{basic_block_forward.1} parent=39 // pred_region
        %p328 = scmp.lt.s32.totalorder %s16, 1
        %s329 = scalar_select %p328, %s16, 1
        %s330 = smul.addr %s329, 18
        %s331 = smul.addr %s330, 8
        %s332 = scalar_lea.vmem %s2, %s331
      $region52: #{basic_block_forward.1} parent=39 // pred_fallthru
        _
      // Predicated region
      $region53: #{basic_block_forward.1} parent=39 // pred_check
        %p333 = pneg %p114
      $region54: #{basic_block_forward.1} parent=39 // pred_check_branch
        %335 = sbr.rel (%p333) target = $region56
      $region55: #{basic_block_forward.1} parent=39 // pred_region
        %p336 = scmp.lt.s32.totalorder %s16, 1
        %s337 = scalar_select %p336, %s16, 1
        %s338 = smul.addr %s337, 18
        %s339 = smul.addr %s338, 8
        %s340 = scalar_lea.vmem %s3, %s339
      $region56: #{basic_block_forward.1} parent=39 // pred_fallthru
        _
    $region40: #{basic_block_forward.1} parent=5 // pred_fallthru
      _
    %p341 = scmp.le.s32.totalorder 1, %s16
    %p342 = scmp.lt.s32.totalorder %s16, 3
    %p343 = pnand %p341, %p342
    %p344 = pneg %p343
    // Predicated region
    $region57: #{basic_block_forward.1} parent=5 // pred_check
      _
    $region58: #{basic_block_forward.1} parent=5 // pred_check_branch
      %346 = sbr.rel (%p343) target = $region60
    $region59: #{basic_block_forward.1} parent=5 // pred_region
      %s347 = ssub.s32 %s16, 1
      %p348 = scmp.lt.s32.totalorder %s21, 1
      %s349 = scalar_select %p348, %s21, 1
      %s350 = smul.addr %s349, 18
      %s351 = smul.addr %s350, 8
      %s352 = scalar_lea.vmem %s0, %s351
      %p353 = pneg %p42
      %p354 = pneg %p39
      %p355 = scmp.lt.s32.totalorder %s21, 1
      %s356 = scalar_select %p355, %s21, 1
      %s357 = smul.addr %s356, 18
      %s358 = smul.addr %s357, 8
      %s359 = scalar_lea.vmem %s1, %s358
      %p360 = pneg %p68
      %p361 = pneg %p65
      %p362 = scmp.lt.s32.totalorder %s21, 1
      %s363 = scalar_select %p362, %s21, 1
      %s364 = smul.addr %s363, 18
      %s365 = smul.addr %s364, 8
      %s366 = scalar_lea.vmem %s2, %s365
      %p367 = pneg %p94
      %p368 = pneg %p91
      %p369 = scmp.lt.s32.totalorder %s21, 1
      %s370 = scalar_select %p369, %s21, 1
      %s371 = smul.addr %s370, 18
      %s372 = smul.addr %s371, 8
      %s373 = scalar_lea.vmem %s3, %s372
      %p374 = pneg %p120
      %p375 = pneg %p117
      %p376 = pneg %p141
      %p377 = pneg %p138
      %p378 = pneg %p162
      %p379 = pneg %p159
      %p380 = pneg %p183
      %p381 = pneg %p180
      %p382 = pneg %p204
      %p383 = pneg %p201
      %p384 = pneg %p225
      %p385 = pneg %p222
      %p386 = pneg %p246
      %p387 = pneg %p243
      %p388 = pneg %p272
      %p389 = pneg %p269
      %p390 = scmp.lt.s32.totalorder %s21, 1
      %s391 = scalar_select %p390, %s21, 1
      %s392 = smul.addr %s391, 8
      %s393 = smul.addr %s392, 8
      %s394 = scalar_lea.vmem %s10, %s393
      %p395 = scmp.lt.s32.totalorder %s21, 1
      %s396 = scalar_select %p395, %s21, 1
      %s397 = smul.addr %s396, 18
      %s398 = smul.addr %s397, 8
      %s399 = scalar_lea.vmem %s0, %s398
      %p400 = scmp.lt.s32.totalorder %s21, 1
      %s401 = scalar_select %p400, %s21, 1
      %s402 = smul.addr %s401, 18
      %s403 = smul.addr %s402, 8
      %s404 = scalar_lea.vmem %s1, %s403
      %p405 = scmp.lt.s32.totalorder %s21, 1
      %s406 = scalar_select %p405, %s21, 1
      %s407 = smul.addr %s406, 18
      %s408 = smul.addr %s407, 8
      %s409 = scalar_lea.vmem %s2, %s408
      %p410 = scmp.lt.s32.totalorder %s21, 1
      %s411 = scalar_select %p410, %s21, 1
      %s412 = smul.addr %s411, 18
      %s413 = smul.addr %s412, 8
      %s414 = scalar_lea.vmem %s3, %s413
      %p415 = scmp.lt.s32.totalorder %s21, 1
      %s416 = scalar_select %p415, %s21, 1
      %s417 = smul.addr %s416, 8
      %s418 = smul.addr %s417, 8
      %s419 = scalar_lea.vmem %s10, %s418
      %v420 = vld [vmem:[%s399] sm:$0xff]
      %v421 = vld [vmem:[%s399 + $0x10] sm:$0xff]
      %v422 = vld [vmem:[%s399 + $0x20] sm:$0xff]
      %v423 = vld [vmem:[%s399 + $0x30] sm:$0xff]
      %v424 = vld [vmem:[%s399 + $0x40] sm:$0xff]
      %v425 = vld [vmem:[%s399 + $0x50] sm:$0xff]
      %v426 = vld [vmem:[%s399 + $0x60] sm:$0xff]
      %v427 = vld [vmem:[%s399 + $0x70] sm:$0xff]
      %v428 = vpack.c.bf16 %v421, %v420
      %v429 = vpack.c.bf16 %v423, %v422
      %v430 = vpack.c.bf16 %v425, %v424
      %v431 = vpack.c.bf16 %v427, %v426
      %v432 = vld [vmem:[%s4] sm:$0xf]
      %v433 = vld [vmem:[%s4 + $0x4] sm:$0xf]
      %v434 = vld [vmem:[%s4 + $0x8] sm:$0xf]
      %v435 = vld [vmem:[%s4 + $0xc] sm:$0xf]
      %v436 = vld [vmem:[%s4 + $0x10] sm:$0xf]
      %v437 = vld [vmem:[%s4 + $0x14] sm:$0xf]
      %v438 = vld [vmem:[%s4 + $0x18] sm:$0xf]
      %v439 = vld [vmem:[%s4 + $0x1c] sm:$0xf]
      %v440 = vld [vmem:[%s4 + $0x20] sm:$0xf]
      %v441 = vld [vmem:[%s4 + $0x24] sm:$0xf]
      %v442 = vld [vmem:[%s4 + $0x28] sm:$0xf]
      %v443 = vld [vmem:[%s4 + $0x2c] sm:$0xf]
      %v444 = vld [vmem:[%s4 + $0x30] sm:$0xf]
      %v445 = vld [vmem:[%s4 + $0x34] sm:$0xf]
      %v446 = vld [vmem:[%s4 + $0x38] sm:$0xf]
      %v447 = vld [vmem:[%s4 + $0x3c] sm:$0xf]
      %v448 = vld [vmem:[%s404] sm:$0xff]
      %v449 = vld [vmem:[%s404 + $0x10] sm:$0xff]
      %v450 = vld [vmem:[%s404 + $0x20] sm:$0xff]
      %v451 = vld [vmem:[%s404 + $0x30] sm:$0xff]
      %v452 = vld [vmem:[%s404 + $0x40] sm:$0xff]
      %v453 = vld [vmem:[%s404 + $0x50] sm:$0xff]
      %v454 = vld [vmem:[%s404 + $0x60] sm:$0xff]
      %v455 = vld [vmem:[%s404 + $0x70] sm:$0xff]
      %v456 = vpack.c.bf16 %v449, %v448
      %v457 = vpack.c.bf16 %v451, %v450
      %v458 = vpack.c.bf16 %v453, %v452
      %v459 = vpack.c.bf16 %v455, %v454
      %s460 = scalar_lea.vmem %s4, 64
      %v461 = vld [vmem:[%s460] sm:$0xf]
      %v462 = vld [vmem:[%s460 + $0x4] sm:$0xf]
      %v463 = vld [vmem:[%s460 + $0x8] sm:$0xf]
      %v464 = vld [vmem:[%s460 + $0xc] sm:$0xf]
      %v465 = vld [vmem:[%s460 + $0x10] sm:$0xf]
      %v466 = vld [vmem:[%s460 + $0x14] sm:$0xf]
      %v467 = vld [vmem:[%s460 + $0x18] sm:$0xf]
      %v468 = vld [vmem:[%s460 + $0x1c] sm:$0xf]
      %v469 = vld [vmem:[%s460 + $0x20] sm:$0xf]
      %v470 = vld [vmem:[%s460 + $0x24] sm:$0xf]
      %v471 = vld [vmem:[%s460 + $0x28] sm:$0xf]
      %v472 = vld [vmem:[%s460 + $0x2c] sm:$0xf]
      %v473 = vld [vmem:[%s460 + $0x30] sm:$0xf]
      %v474 = vld [vmem:[%s460 + $0x34] sm:$0xf]
      %v475 = vld [vmem:[%s460 + $0x38] sm:$0xf]
      %v476 = vld [vmem:[%s460 + $0x3c] sm:$0xf]
      %v493 = vunpack.c.l.b16 %v461
      %v494 = vunpack.c.l.b16 %v462
      %v495 = vunpack.c.l.b16 %v463
      %v496 = vunpack.c.l.b16 %v464
      %v497 = vunpack.c.l.b16 %v465
      %v498 = vunpack.c.l.b16 %v466
      %v499 = vunpack.c.l.b16 %v467
      %v500 = vunpack.c.l.b16 %v468
      %v501 = vunpack.c.l.b16 %v469
      %v502 = vunpack.c.l.b16 %v470
      %v503 = vunpack.c.l.b16 %v471
      %v504 = vunpack.c.l.b16 %v472
      %v505 = vunpack.c.l.b16 %v473
      %v506 = vunpack.c.l.b16 %v474
      %v507 = vunpack.c.l.b16 %v475
      %v508 = vunpack.c.l.b16 %v476
      %v509 = vpack.c.b16 %v494, %v493
      %v510 = vpack.c.b16 %v496, %v495
      %v511 = vpack.c.b16 %v498, %v497
      %v512 = vpack.c.b16 %v500, %v499
      %v513 = vpack.c.b16 %v502, %v501
      %v514 = vpack.c.b16 %v504, %v503
      %v515 = vpack.c.b16 %v506, %v505
      %v516 = vpack.c.b16 %v508, %v507
      %525 = vmatpush.bf16.msra.mxu0 %v516
      %526 = vmatpush.bf16.msra.mxu0 %v515
      %527 = vmatpush.bf16.msra.mxu0 %v514
      %528 = vmatpush.bf16.msra.mxu0 %v513
      %529 = vmatpush.bf16.msra.mxu0 %v512
      %530 = vmatpush.bf16.msra.mxu0 %v511
      %531 = vmatpush.bf16.msra.mxu0 %v510
      %532 = vmatpush.bf16.msra.mxu0 %v509
      %533 = vmatmul.bf16.gmra.mxu0 %v456
      %v534 = vpop.f32.mrf.mxu0
      %v535 = vadd.f32 0.0, %v534
      %v536 = vpop.f32.mrf.mxu0
      %v537 = vadd.f32 0.0, %v536
      %538 = vmatmul.bf16.gmra.mxu0 %v457
      %v539 = vpop.f32.mrf.mxu0
      %v540 = vadd.f32 0.0, %v539
      %v541 = vpop.f32.mrf.mxu0
      %v542 = vadd.f32 0.0, %v541
      %543 = vmatmul.bf16.gmra.mxu0 %v458
      %v544 = vpop.f32.mrf.mxu0
      %v545 = vadd.f32 0.0, %v544
      %v546 = vpop.f32.mrf.mxu0
      %v547 = vadd.f32 0.0, %v546
      %548 = vmatmul.bf16.gmra.mxu0 %v459
      %v549 = vpop.f32.mrf.mxu0
      %v550 = vadd.f32 0.0, %v549
      %v551 = vpop.f32.mrf.mxu0
      %v552 = vadd.f32 0.0, %v551
      %553 = vdwg.mxu0
      %v570 = vunpack.c.l.b16 %v432
      %v571 = vunpack.c.l.b16 %v433
      %v572 = vunpack.c.l.b16 %v434
      %v573 = vunpack.c.l.b16 %v435
      %v574 = vunpack.c.l.b16 %v436
      %v575 = vunpack.c.l.b16 %v437
      %v576 = vunpack.c.l.b16 %v438
      %v577 = vunpack.c.l.b16 %v439
      %v578 = vunpack.c.l.b16 %v440
      %v579 = vunpack.c.l.b16 %v441
      %v580 = vunpack.c.l.b16 %v442
      %v581 = vunpack.c.l.b16 %v443
      %v582 = vunpack.c.l.b16 %v444
      %v583 = vunpack.c.l.b16 %v445
      %v584 = vunpack.c.l.b16 %v446
      %v585 = vunpack.c.l.b16 %v447
      %v586 = vpack.c.b16 %v571, %v570
      %v587 = vpack.c.b16 %v573, %v572
      %v588 = vpack.c.b16 %v575, %v574
      %v589 = vpack.c.b16 %v577, %v576
      %v590 = vpack.c.b16 %v579, %v578
      %v591 = vpack.c.b16 %v581, %v580
      %v592 = vpack.c.b16 %v583, %v582
      %v593 = vpack.c.b16 %v585, %v584
      %602 = vmatpush.bf16.msra.mxu0 %v593
      %603 = vmatpush.bf16.msra.mxu0 %v592
      %604 = vmatpush.bf16.msra.mxu0 %v591
      %605 = vmatpush.bf16.msra.mxu0 %v590
      %606 = vmatpush.bf16.msra.mxu0 %v589
      %607 = vmatpush.bf16.msra.mxu0 %v588
      %608 = vmatpush.bf16.msra.mxu0 %v587
      %609 = vmatpush.bf16.msra.mxu0 %v586
      %610 = vmatmul.bf16.gmra.mxu0 %v428
      %v611 = vpop.f32.mrf.mxu0
      %v612 = vadd.f32 %v535, %v611
      %v613 = vpop.f32.mrf.mxu0
      %v614 = vadd.f32 %v537, %v613
      %615 = vmatmul.bf16.gmra.mxu0 %v429
      %v616 = vpop.f32.mrf.mxu0
      %v617 = vadd.f32 %v540, %v616
      %v618 = vpop.f32.mrf.mxu0
      %v619 = vadd.f32 %v542, %v618
      %620 = vmatmul.bf16.gmra.mxu0 %v430
      %v621 = vpop.f32.mrf.mxu0
      %v622 = vadd.f32 %v545, %v621
      %v623 = vpop.f32.mrf.mxu0
      %v624 = vadd.f32 %v547, %v623
      %625 = vmatmul.bf16.gmra.mxu0 %v431
      %v626 = vpop.f32.mrf.mxu0
      %v627 = vadd.f32 %v550, %v626
      %v628 = vpop.f32.mrf.mxu0
      %v629 = vadd.f32 %v552, %v628
      %630 = vdwg.mxu0
      %v631 = vld [vmem:[%s399 + $0x1] sm:$0xff]
      %v632 = vld [vmem:[%s399 + $0x11] sm:$0xff]
      %v633 = vld [vmem:[%s399 + $0x21] sm:$0xff]
      %v634 = vld [vmem:[%s399 + $0x31] sm:$0xff]
      %v635 = vld [vmem:[%s399 + $0x41] sm:$0xff]
      %v636 = vld [vmem:[%s399 + $0x51] sm:$0xff]
      %v637 = vld [vmem:[%s399 + $0x61] sm:$0xff]
      %v638 = vld [vmem:[%s399 + $0x71] sm:$0xff]
      %v639 = vpack.c.bf16 %v632, %v631
      %v640 = vpack.c.bf16 %v634, %v633
      %v641 = vpack.c.bf16 %v636, %v635
      %v642 = vpack.c.bf16 %v638, %v637
      %s643 = scalar_lea.vmem %s4, 128
      %v644 = vld [vmem:[%s643] sm:$0xf]
      %v645 = vld [vmem:[%s643 + $0x4] sm:$0xf]
      %v646 = vld [vmem:[%s643 + $0x8] sm:$0xf]
      %v647 = vld [vmem:[%s643 + $0xc] sm:$0xf]
      %v648 = vld [vmem:[%s643 + $0x10] sm:$0xf]
      %v649 = vld [vmem:[%s643 + $0x14] sm:$0xf]
      %v650 = vld [vmem:[%s643 + $0x18] sm:$0xf]
      %v651 = vld [vmem:[%s643 + $0x1c] sm:$0xf]
      %v652 = vld [vmem:[%s643 + $0x20] sm:$0xf]
      %v653 = vld [vmem:[%s643 + $0x24] sm:$0xf]
      %v654 = vld [vmem:[%s643 + $0x28] sm:$0xf]
      %v655 = vld [vmem:[%s643 + $0x2c] sm:$0xf]
      %v656 = vld [vmem:[%s643 + $0x30] sm:$0xf]
      %v657 = vld [vmem:[%s643 + $0x34] sm:$0xf]
      %v658 = vld [vmem:[%s643 + $0x38] sm:$0xf]
      %v659 = vld [vmem:[%s643 + $0x3c] sm:$0xf]
      %v676 = vunpack.c.l.b16 %v644
      %v677 = vunpack.c.l.b16 %v645
      %v678 = vunpack.c.l.b16 %v646
      %v679 = vunpack.c.l.b16 %v647
      %v680 = vunpack.c.l.b16 %v648
      %v681 = vunpack.c.l.b16 %v649
      %v682 = vunpack.c.l.b16 %v650
      %v683 = vunpack.c.l.b16 %v651
      %v684 = vunpack.c.l.b16 %v652
      %v685 = vunpack.c.l.b16 %v653
      %v686 = vunpack.c.l.b16 %v654
      %v687 = vunpack.c.l.b16 %v655
      %v688 = vunpack.c.l.b16 %v656
      %v689 = vunpack.c.l.b16 %v657
      %v690 = vunpack.c.l.b16 %v658
      %v691 = vunpack.c.l.b16 %v659
      %v692 = vpack.c.b16 %v677, %v676
      %v693 = vpack.c.b16 %v679, %v678
      %v694 = vpack.c.b16 %v681, %v680
      %v695 = vpack.c.b16 %v683, %v682
      %v696 = vpack.c.b16 %v685, %v684
      %v697 = vpack.c.b16 %v687, %v686
      %v698 = vpack.c.b16 %v689, %v688
      %v699 = vpack.c.b16 %v691, %v690
      %708 = vmatpush.bf16.msra.mxu0 %v699
      %709 = vmatpush.bf16.msra.mxu0 %v698
      %710 = vmatpush.bf16.msra.mxu0 %v697
      %711 = vmatpush.bf16.msra.mxu0 %v696
      %712 = vmatpush.bf16.msra.mxu0 %v695
      %713 = vmatpush.bf16.msra.mxu0 %v694
      %714 = vmatpush.bf16.msra.mxu0 %v693
      %715 = vmatpush.bf16.msra.mxu0 %v692
      %716 = vmatmul.bf16.gmra.mxu0 %v639
      %v717 = vpop.f32.mrf.mxu0
      %v718 = vadd.f32 0.0, %v717
      %v719 = vpop.f32.mrf.mxu0
      %v720 = vadd.f32 0.0, %v719
      %721 = vmatmul.bf16.gmra.mxu0 %v640
      %v722 = vpop.f32.mrf.mxu0
      %v723 = vadd.f32 0.0, %v722
      %v724 = vpop.f32.mrf.mxu0
      %v725 = vadd.f32 0.0, %v724
      %726 = vmatmul.bf16.gmra.mxu0 %v641
      %v727 = vpop.f32.mrf.mxu0
      %v728 = vadd.f32 0.0, %v727
      %v729 = vpop.f32.mrf.mxu0
      %v730 = vadd.f32 0.0, %v729
      %731 = vmatmul.bf16.gmra.mxu0 %v642
      %v732 = vpop.f32.mrf.mxu0
      %v733 = vadd.f32 0.0, %v732
      %v734 = vpop.f32.mrf.mxu0
      %v735 = vadd.f32 0.0, %v734
      %736 = vdwg.mxu0
      %v737 = vadd.f32 %v612, %v718
      %v738 = vadd.f32 %v614, %v720
      %v739 = vadd.f32 %v617, %v723
      %v740 = vadd.f32 %v619, %v725
      %v741 = vadd.f32 %v622, %v728
      %v742 = vadd.f32 %v624, %v730
      %v743 = vadd.f32 %v627, %v733
      %v744 = vadd.f32 %v629, %v735
      %v745 = vld [vmem:[%s409] sm:$0xff]
      %v746 = vld [vmem:[%s409 + $0x10] sm:$0xff]
      %v747 = vld [vmem:[%s409 + $0x20] sm:$0xff]
      %v748 = vld [vmem:[%s409 + $0x30] sm:$0xff]
      %v749 = vld [vmem:[%s409 + $0x40] sm:$0xff]
      %v750 = vld [vmem:[%s409 + $0x50] sm:$0xff]
      %v751 = vld [vmem:[%s409 + $0x60] sm:$0xff]
      %v752 = vld [vmem:[%s409 + $0x70] sm:$0xff]
      %v753 = vpack.c.bf16 %v746, %v745
      %v754 = vpack.c.bf16 %v748, %v747
      %v755 = vpack.c.bf16 %v750, %v749
      %v756 = vpack.c.bf16 %v752, %v751
      %s757 = scalar_lea.vmem %s4, 192
      %v758 = vld [vmem:[%s757] sm:$0xf]
      %v759 = vld [vmem:[%s757 + $0x4] sm:$0xf]
      %v760 = vld [vmem:[%s757 + $0x8] sm:$0xf]
      %v761 = vld [vmem:[%s757 + $0xc] sm:$0xf]
      %v762 = vld [vmem:[%s757 + $0x10] sm:$0xf]
      %v763 = vld [vmem:[%s757 + $0x14] sm:$0xf]
      %v764 = vld [vmem:[%s757 + $0x18] sm:$0xf]
      %v765 = vld [vmem:[%s757 + $0x1c] sm:$0xf]
      %v766 = vld [vmem:[%s757 + $0x20] sm:$0xf]
      %v767 = vld [vmem:[%s757 + $0x24] sm:$0xf]
      %v768 = vld [vmem:[%s757 + $0x28] sm:$0xf]
      %v769 = vld [vmem:[%s757 + $0x2c] sm:$0xf]
      %v770 = vld [vmem:[%s757 + $0x30] sm:$0xf]
      %v771 = vld [vmem:[%s757 + $0x34] sm:$0xf]
      %v772 = vld [vmem:[%s757 + $0x38] sm:$0xf]
      %v773 = vld [vmem:[%s757 + $0x3c] sm:$0xf]
      %v790 = vunpack.c.l.b16 %v758
      %v791 = vunpack.c.l.b16 %v759
      %v792 = vunpack.c.l.b16 %v760
      %v793 = vunpack.c.l.b16 %v761
      %v794 = vunpack.c.l.b16 %v762
      %v795 = vunpack.c.l.b16 %v763
      %v796 = vunpack.c.l.b16 %v764
      %v797 = vunpack.c.l.b16 %v765
      %v798 = vunpack.c.l.b16 %v766
      %v799 = vunpack.c.l.b16 %v767
      %v800 = vunpack.c.l.b16 %v768
      %v801 = vunpack.c.l.b16 %v769
      %v802 = vunpack.c.l.b16 %v770
      %v803 = vunpack.c.l.b16 %v771
      %v804 = vunpack.c.l.b16 %v772
      %v805 = vunpack.c.l.b16 %v773
      %v806 = vpack.c.b16 %v791, %v790
      %v807 = vpack.c.b16 %v793, %v792
      %v808 = vpack.c.b16 %v795, %v794
      %v809 = vpack.c.b16 %v797, %v796
      %v810 = vpack.c.b16 %v799, %v798
      %v811 = vpack.c.b16 %v801, %v800
      %v812 = vpack.c.b16 %v803, %v802
      %v813 = vpack.c.b16 %v805, %v804
      %822 = vmatpush.bf16.msra.mxu0 %v813
      %823 = vmatpush.bf16.msra.mxu0 %v812
      %824 = vmatpush.bf16.msra.mxu0 %v811
      %825 = vmatpush.bf16.msra.mxu0 %v810
      %826 = vmatpush.bf16.msra.mxu0 %v809
      %827 = vmatpush.bf16.msra.mxu0 %v808
      %828 = vmatpush.bf16.msra.mxu0 %v807
      %829 = vmatpush.bf16.msra.mxu0 %v806
      %830 = vmatmul.bf16.gmra.mxu0 %v753
      %v831 = vpop.f32.mrf.mxu0
      %v832 = vadd.f32 0.0, %v831
      %v833 = vpop.f32.mrf.mxu0
      %v834 = vadd.f32 0.0, %v833
      %835 = vmatmul.bf16.gmra.mxu0 %v754
      %v836 = vpop.f32.mrf.mxu0
      %v837 = vadd.f32 0.0, %v836
      %v838 = vpop.f32.mrf.mxu0
      %v839 = vadd.f32 0.0, %v838
      %840 = vmatmul.bf16.gmra.mxu0 %v755
      %v841 = vpop.f32.mrf.mxu0
      %v842 = vadd.f32 0.0, %v841
      %v843 = vpop.f32.mrf.mxu0
      %v844 = vadd.f32 0.0, %v843
      %845 = vmatmul.bf16.gmra.mxu0 %v756
      %v846 = vpop.f32.mrf.mxu0
      %v847 = vadd.f32 0.0, %v846
      %v848 = vpop.f32.mrf.mxu0
      %v849 = vadd.f32 0.0, %v848
      %850 = vdwg.mxu0
      %v851 = vadd.f32 %v737, %v832
      %v852 = vadd.f32 %v738, %v834
      %v853 = vadd.f32 %v739, %v837
      %v854 = vadd.f32 %v740, %v839
      %v855 = vadd.f32 %v741, %v842
      %v856 = vadd.f32 %v742, %v844
      %v857 = vadd.f32 %v743, %v847
      %v858 = vadd.f32 %v744, %v849
      %v859 = vld [vmem:[%s414] sm:$0xff]
      %v860 = vld [vmem:[%s414 + $0x10] sm:$0xff]
      %v861 = vld [vmem:[%s414 + $0x20] sm:$0xff]
      %v862 = vld [vmem:[%s414 + $0x30] sm:$0xff]
      %v863 = vld [vmem:[%s414 + $0x40] sm:$0xff]
      %v864 = vld [vmem:[%s414 + $0x50] sm:$0xff]
      %v865 = vld [vmem:[%s414 + $0x60] sm:$0xff]
      %v866 = vld [vmem:[%s414 + $0x70] sm:$0xff]
      %v867 = vpack.c.bf16 %v860, %v859
      %v868 = vpack.c.bf16 %v862, %v861
      %v869 = vpack.c.bf16 %v864, %v863
      %v870 = vpack.c.bf16 %v866, %v865
      %s871 = scalar_lea.vmem %s4, 256
      %v872 = vld [vmem:[%s871] sm:$0xf]
      %v873 = vld [vmem:[%s871 + $0x4] sm:$0xf]
      %v874 = vld [vmem:[%s871 + $0x8] sm:$0xf]
      %v875 = vld [vmem:[%s871 + $0xc] sm:$0xf]
      %v876 = vld [vmem:[%s871 + $0x10] sm:$0xf]
      %v877 = vld [vmem:[%s871 + $0x14] sm:$0xf]
      %v878 = vld [vmem:[%s871 + $0x18] sm:$0xf]
      %v879 = vld [vmem:[%s871 + $0x1c] sm:$0xf]
      %v880 = vld [vmem:[%s871 + $0x20] sm:$0xf]
      %v881 = vld [vmem:[%s871 + $0x24] sm:$0xf]
      %v882 = vld [vmem:[%s871 + $0x28] sm:$0xf]
      %v883 = vld [vmem:[%s871 + $0x2c] sm:$0xf]
      %v884 = vld [vmem:[%s871 + $0x30] sm:$0xf]
      %v885 = vld [vmem:[%s871 + $0x34] sm:$0xf]
      %v886 = vld [vmem:[%s871 + $0x38] sm:$0xf]
      %v887 = vld [vmem:[%s871 + $0x3c] sm:$0xf]
      %v904 = vunpack.c.l.b16 %v872
      %v905 = vunpack.c.l.b16 %v873
      %v906 = vunpack.c.l.b16 %v874
      %v907 = vunpack.c.l.b16 %v875
      %v908 = vunpack.c.l.b16 %v876
      %v909 = vunpack.c.l.b16 %v877
      %v910 = vunpack.c.l.b16 %v878
      %v911 = vunpack.c.l.b16 %v879
      %v912 = vunpack.c.l.b16 %v880
      %v913 = vunpack.c.l.b16 %v881
      %v914 = vunpack.c.l.b16 %v882
      %v915 = vunpack.c.l.b16 %v883
      %v916 = vunpack.c.l.b16 %v884
      %v917 = vunpack.c.l.b16 %v885
      %v918 = vunpack.c.l.b16 %v886
      %v919 = vunpack.c.l.b16 %v887
      %v920 = vpack.c.b16 %v905, %v904
      %v921 = vpack.c.b16 %v907, %v906
      %v922 = vpack.c.b16 %v909, %v908
      %v923 = vpack.c.b16 %v911, %v910
      %v924 = vpack.c.b16 %v913, %v912
      %v925 = vpack.c.b16 %v915, %v914
      %v926 = vpack.c.b16 %v917, %v916
      %v927 = vpack.c.b16 %v919, %v918
      %936 = vmatpush.bf16.msra.mxu0 %v927
      %937 = vmatpush.bf16.msra.mxu0 %v926
      %938 = vmatpush.bf16.msra.mxu0 %v925
      %939 = vmatpush.bf16.msra.mxu0 %v924
      %940 = vmatpush.bf16.msra.mxu0 %v923
      %941 = vmatpush.bf16.msra.mxu0 %v922
      %942 = vmatpush.bf16.msra.mxu0 %v921
      %943 = vmatpush.bf16.msra.mxu0 %v920
      %944 = vmatmul.bf16.gmra.mxu0 %v867
      %v945 = vpop.f32.mrf.mxu0
      %v946 = vadd.f32 0.0, %v945
      %v947 = vpop.f32.mrf.mxu0
      %v948 = vadd.f32 0.0, %v947
      %949 = vmatmul.bf16.gmra.mxu0 %v868
      %v950 = vpop.f32.mrf.mxu0
      %v951 = vadd.f32 0.0, %v950
      %v952 = vpop.f32.mrf.mxu0
      %v953 = vadd.f32 0.0, %v952
      %954 = vmatmul.bf16.gmra.mxu0 %v869
      %v955 = vpop.f32.mrf.mxu0
      %v956 = vadd.f32 0.0, %v955
      %v957 = vpop.f32.mrf.mxu0
      %v958 = vadd.f32 0.0, %v957
      %959 = vmatmul.bf16.gmra.mxu0 %v870
      %v960 = vpop.f32.mrf.mxu0
      %v961 = vadd.f32 0.0, %v960
      %v962 = vpop.f32.mrf.mxu0
      %v963 = vadd.f32 0.0, %v962
      %964 = vdwg.mxu0
      %v965 = vadd.f32 %v851, %v946
      %v966 = vadd.f32 %v852, %v948
      %v967 = vadd.f32 %v853, %v951
      %v968 = vadd.f32 %v854, %v953
      %v969 = vadd.f32 %v855, %v956
      %v970 = vadd.f32 %v856, %v958
      %v971 = vadd.f32 %v857, %v961
      %v972 = vadd.f32 %v858, %v963
      %v973 = vld [vmem:[%s409 + $0x1] sm:$0xff]
      %v974 = vld [vmem:[%s409 + $0x11] sm:$0xff]
      %v975 = vld [vmem:[%s409 + $0x21] sm:$0xff]
      %v976 = vld [vmem:[%s409 + $0x31] sm:$0xff]
      %v977 = vld [vmem:[%s409 + $0x41] sm:$0xff]
      %v978 = vld [vmem:[%s409 + $0x51] sm:$0xff]
      %v979 = vld [vmem:[%s409 + $0x61] sm:$0xff]
      %v980 = vld [vmem:[%s409 + $0x71] sm:$0xff]
      %v981 = vpack.c.bf16 %v974, %v973
      %v982 = vpack.c.bf16 %v976, %v975
      %v983 = vpack.c.bf16 %v978, %v977
      %v984 = vpack.c.bf16 %v980, %v979
      %s985 = scalar_lea.vmem %s4, 320
      %v986 = vld [vmem:[%s985] sm:$0xf]
      %v987 = vld [vmem:[%s985 + $0x4] sm:$0xf]
      %v988 = vld [vmem:[%s985 + $0x8] sm:$0xf]
      %v989 = vld [vmem:[%s985 + $0xc] sm:$0xf]
      %v990 = vld [vmem:[%s985 + $0x10] sm:$0xf]
      %v991 = vld [vmem:[%s985 + $0x14] sm:$0xf]
      %v992 = vld [vmem:[%s985 + $0x18] sm:$0xf]
      %v993 = vld [vmem:[%s985 + $0x1c] sm:$0xf]
      %v994 = vld [vmem:[%s985 + $0x20] sm:$0xf]
      %v995 = vld [vmem:[%s985 + $0x24] sm:$0xf]
      %v996 = vld [vmem:[%s985 + $0x28] sm:$0xf]
      %v997 = vld [vmem:[%s985 + $0x2c] sm:$0xf]
      %v998 = vld [vmem:[%s985 + $0x30] sm:$0xf]
      %v999 = vld [vmem:[%s985 + $0x34] sm:$0xf]
      %v1000 = vld [vmem:[%s985 + $0x38] sm:$0xf]
      %v1001 = vld [vmem:[%s985 + $0x3c] sm:$0xf]
      %v1018 = vunpack.c.l.b16 %v986
      %v1019 = vunpack.c.l.b16 %v987
      %v1020 = vunpack.c.l.b16 %v988
      %v1021 = vunpack.c.l.b16 %v989
      %v1022 = vunpack.c.l.b16 %v990
      %v1023 = vunpack.c.l.b16 %v991
      %v1024 = vunpack.c.l.b16 %v992
      %v1025 = vunpack.c.l.b16 %v993
      %v1026 = vunpack.c.l.b16 %v994
      %v1027 = vunpack.c.l.b16 %v995
      %v1028 = vunpack.c.l.b16 %v996
      %v1029 = vunpack.c.l.b16 %v997
      %v1030 = vunpack.c.l.b16 %v998
      %v1031 = vunpack.c.l.b16 %v999
      %v1032 = vunpack.c.l.b16 %v1000
      %v1033 = vunpack.c.l.b16 %v1001
      %v1034 = vpack.c.b16 %v1019, %v1018
      %v1035 = vpack.c.b16 %v1021, %v1020
      %v1036 = vpack.c.b16 %v1023, %v1022
      %v1037 = vpack.c.b16 %v1025, %v1024
      %v1038 = vpack.c.b16 %v1027, %v1026
      %v1039 = vpack.c.b16 %v1029, %v1028
      %v1040 = vpack.c.b16 %v1031, %v1030
      %v1041 = vpack.c.b16 %v1033, %v1032
      %1050 = vmatpush.bf16.msra.mxu0 %v1041
      %1051 = vmatpush.bf16.msra.mxu0 %v1040
      %1052 = vmatpush.bf16.msra.mxu0 %v1039
      %1053 = vmatpush.bf16.msra.mxu0 %v1038
      %1054 = vmatpush.bf16.msra.mxu0 %v1037
      %1055 = vmatpush.bf16.msra.mxu0 %v1036
      %1056 = vmatpush.bf16.msra.mxu0 %v1035
      %1057 = vmatpush.bf16.msra.mxu0 %v1034
      %1058 = vmatmul.bf16.gmra.mxu0 %v981
      %v1059 = vpop.f32.mrf.mxu0
      %v1060 = vadd.f32 0.0, %v1059
      %v1061 = vpop.f32.mrf.mxu0
      %v1062 = vadd.f32 0.0, %v1061
      %1063 = vmatmul.bf16.gmra.mxu0 %v982
      %v1064 = vpop.f32.mrf.mxu0
      %v1065 = vadd.f32 0.0, %v1064
      %v1066 = vpop.f32.mrf.mxu0
      %v1067 = vadd.f32 0.0, %v1066
      %1068 = vmatmul.bf16.gmra.mxu0 %v983
      %v1069 = vpop.f32.mrf.mxu0
      %v1070 = vadd.f32 0.0, %v1069
      %v1071 = vpop.f32.mrf.mxu0
      %v1072 = vadd.f32 0.0, %v1071
      %1073 = vmatmul.bf16.gmra.mxu0 %v984
      %v1074 = vpop.f32.mrf.mxu0
      %v1075 = vadd.f32 0.0, %v1074
      %v1076 = vpop.f32.mrf.mxu0
      %v1077 = vadd.f32 0.0, %v1076
      %1078 = vdwg.mxu0
      %v1079 = vadd.f32 %v965, %v1060
      %v1080 = vadd.f32 %v966, %v1062
      %v1081 = vadd.f32 %v967, %v1065
      %v1082 = vadd.f32 %v968, %v1067
      %v1083 = vadd.f32 %v969, %v1070
      %v1084 = vadd.f32 %v970, %v1072
      %v1085 = vadd.f32 %v971, %v1075
      %v1086 = vadd.f32 %v972, %v1077
      %s1087 = scalar_lea.vmem %s399, 16
      %v1088 = vld [vmem:[%s1087] sm:$0xff]
      %v1089 = vld [vmem:[%s1087 + $0x10] sm:$0xff]
      %v1090 = vld [vmem:[%s1087 + $0x20] sm:$0xff]
      %v1091 = vld [vmem:[%s1087 + $0x30] sm:$0xff]
      %v1092 = vld [vmem:[%s1087 + $0x40] sm:$0xff]
      %v1093 = vld [vmem:[%s1087 + $0x50] sm:$0xff]
      %v1094 = vld [vmem:[%s1087 + $0x60] sm:$0xff]
      %v1095 = vld [vmem:[%s1087 + $0x70] sm:$0xff]
      %v1096 = vpack.c.bf16 %v1089, %v1088
      %v1097 = vpack.c.bf16 %v1091, %v1090
      %v1098 = vpack.c.bf16 %v1093, %v1092
      %v1099 = vpack.c.bf16 %v1095, %v1094
      %s1100 = scalar_lea.vmem %s4, 384
      %v1101 = vld [vmem:[%s1100] sm:$0xf]
      %v1102 = vld [vmem:[%s1100 + $0x4] sm:$0xf]
      %v1103 = vld [vmem:[%s1100 + $0x8] sm:$0xf]
      %v1104 = vld [vmem:[%s1100 + $0xc] sm:$0xf]
      %v1105 = vld [vmem:[%s1100 + $0x10] sm:$0xf]
      %v1106 = vld [vmem:[%s1100 + $0x14] sm:$0xf]
      %v1107 = vld [vmem:[%s1100 + $0x18] sm:$0xf]
      %v1108 = vld [vmem:[%s1100 + $0x1c] sm:$0xf]
      %v1109 = vld [vmem:[%s1100 + $0x20] sm:$0xf]
      %v1110 = vld [vmem:[%s1100 + $0x24] sm:$0xf]
      %v1111 = vld [vmem:[%s1100 + $0x28] sm:$0xf]
      %v1112 = vld [vmem:[%s1100 + $0x2c] sm:$0xf]
      %v1113 = vld [vmem:[%s1100 + $0x30] sm:$0xf]
      %v1114 = vld [vmem:[%s1100 + $0x34] sm:$0xf]
      %v1115 = vld [vmem:[%s1100 + $0x38] sm:$0xf]
      %v1116 = vld [vmem:[%s1100 + $0x3c] sm:$0xf]
      %v1133 = vunpack.c.l.b16 %v1101
      %v1134 = vunpack.c.l.b16 %v1102
      %v1135 = vunpack.c.l.b16 %v1103
      %v1136 = vunpack.c.l.b16 %v1104
      %v1137 = vunpack.c.l.b16 %v1105
      %v1138 = vunpack.c.l.b16 %v1106
      %v1139 = vunpack.c.l.b16 %v1107
      %v1140 = vunpack.c.l.b16 %v1108
      %v1141 = vunpack.c.l.b16 %v1109
      %v1142 = vunpack.c.l.b16 %v1110
      %v1143 = vunpack.c.l.b16 %v1111
      %v1144 = vunpack.c.l.b16 %v1112
      %v1145 = vunpack.c.l.b16 %v1113
      %v1146 = vunpack.c.l.b16 %v1114
      %v1147 = vunpack.c.l.b16 %v1115
      %v1148 = vunpack.c.l.b16 %v1116
      %v1149 = vpack.c.b16 %v1134, %v1133
      %v1150 = vpack.c.b16 %v1136, %v1135
      %v1151 = vpack.c.b16 %v1138, %v1137
      %v1152 = vpack.c.b16 %v1140, %v1139
      %v1153 = vpack.c.b16 %v1142, %v1141
      %v1154 = vpack.c.b16 %v1144, %v1143
      %v1155 = vpack.c.b16 %v1146, %v1145
      %v1156 = vpack.c.b16 %v1148, %v1147
      %1165 = vmatpush.bf16.msra.mxu0 %v1156
      %1166 = vmatpush.bf16.msra.mxu0 %v1155
      %1167 = vmatpush.bf16.msra.mxu0 %v1154
      %1168 = vmatpush.bf16.msra.mxu0 %v1153
      %1169 = vmatpush.bf16.msra.mxu0 %v1152
      %1170 = vmatpush.bf16.msra.mxu0 %v1151
      %1171 = vmatpush.bf16.msra.mxu0 %v1150
      %1172 = vmatpush.bf16.msra.mxu0 %v1149
      %1173 = vmatmul.bf16.gmra.mxu0 %v1096
      %v1174 = vpop.f32.mrf.mxu0
      %v1175 = vadd.f32 0.0, %v1174
      %v1176 = vpop.f32.mrf.mxu0
      %v1177 = vadd.f32 0.0, %v1176
      %1178 = vmatmul.bf16.gmra.mxu0 %v1097
      %v1179 = vpop.f32.mrf.mxu0
      %v1180 = vadd.f32 0.0, %v1179
      %v1181 = vpop.f32.mrf.mxu0
      %v1182 = vadd.f32 0.0, %v1181
      %1183 = vmatmul.bf16.gmra.mxu0 %v1098
      %v1184 = vpop.f32.mrf.mxu0
      %v1185 = vadd.f32 0.0, %v1184
      %v1186 = vpop.f32.mrf.mxu0
      %v1187 = vadd.f32 0.0, %v1186
      %1188 = vmatmul.bf16.gmra.mxu0 %v1099
      %v1189 = vpop.f32.mrf.mxu0
      %v1190 = vadd.f32 0.0, %v1189
      %v1191 = vpop.f32.mrf.mxu0
      %v1192 = vadd.f32 0.0, %v1191
      %1193 = vdwg.mxu0
      %v1194 = vadd.f32 %v1079, %v1175
      %v1195 = vadd.f32 %v1080, %v1177
      %v1196 = vadd.f32 %v1081, %v1180
      %v1197 = vadd.f32 %v1082, %v1182
      %v1198 = vadd.f32 %v1083, %v1185
      %v1199 = vadd.f32 %v1084, %v1187
      %v1200 = vadd.f32 %v1085, %v1190
      %v1201 = vadd.f32 %v1086, %v1192
      %s1202 = scalar_lea.vmem %s404, 16
      %v1203 = vld [vmem:[%s1202] sm:$0xff]
      %v1204 = vld [vmem:[%s1202 + $0x10] sm:$0xff]
      %v1205 = vld [vmem:[%s1202 + $0x20] sm:$0xff]
      %v1206 = vld [vmem:[%s1202 + $0x30] sm:$0xff]
      %v1207 = vld [vmem:[%s1202 + $0x40] sm:$0xff]
      %v1208 = vld [vmem:[%s1202 + $0x50] sm:$0xff]
      %v1209 = vld [vmem:[%s1202 + $0x60] sm:$0xff]
      %v1210 = vld [vmem:[%s1202 + $0x70] sm:$0xff]
      %v1211 = vpack.c.bf16 %v1204, %v1203
      %v1212 = vpack.c.bf16 %v1206, %v1205
      %v1213 = vpack.c.bf16 %v1208, %v1207
      %v1214 = vpack.c.bf16 %v1210, %v1209
      %s1215 = scalar_lea.vmem %s4, 448
      %v1216 = vld [vmem:[%s1215] sm:$0xf]
      %v1217 = vld [vmem:[%s1215 + $0x4] sm:$0xf]
      %v1218 = vld [vmem:[%s1215 + $0x8] sm:$0xf]
      %v1219 = vld [vmem:[%s1215 + $0xc] sm:$0xf]
      %v1220 = vld [vmem:[%s1215 + $0x10] sm:$0xf]
      %v1221 = vld [vmem:[%s1215 + $0x14] sm:$0xf]
      %v1222 = vld [vmem:[%s1215 + $0x18] sm:$0xf]
      %v1223 = vld [vmem:[%s1215 + $0x1c] sm:$0xf]
      %v1224 = vld [vmem:[%s1215 + $0x20] sm:$0xf]
      %v1225 = vld [vmem:[%s1215 + $0x24] sm:$0xf]
      %v1226 = vld [vmem:[%s1215 + $0x28] sm:$0xf]
      %v1227 = vld [vmem:[%s1215 + $0x2c] sm:$0xf]
      %v1228 = vld [vmem:[%s1215 + $0x30] sm:$0xf]
      %v1229 = vld [vmem:[%s1215 + $0x34] sm:$0xf]
      %v1230 = vld [vmem:[%s1215 + $0x38] sm:$0xf]
      %v1231 = vld [vmem:[%s1215 + $0x3c] sm:$0xf]
      %v1248 = vunpack.c.l.b16 %v1216
      %v1249 = vunpack.c.l.b16 %v1217
      %v1250 = vunpack.c.l.b16 %v1218
      %v1251 = vunpack.c.l.b16 %v1219
      %v1252 = vunpack.c.l.b16 %v1220
      %v1253 = vunpack.c.l.b16 %v1221
      %v1254 = vunpack.c.l.b16 %v1222
      %v1255 = vunpack.c.l.b16 %v1223
      %v1256 = vunpack.c.l.b16 %v1224
      %v1257 = vunpack.c.l.b16 %v1225
      %v1258 = vunpack.c.l.b16 %v1226
      %v1259 = vunpack.c.l.b16 %v1227
      %v1260 = vunpack.c.l.b16 %v1228
      %v1261 = vunpack.c.l.b16 %v1229
      %v1262 = vunpack.c.l.b16 %v1230
      %v1263 = vunpack.c.l.b16 %v1231
      %v1264 = vpack.c.b16 %v1249, %v1248
      %v1265 = vpack.c.b16 %v1251, %v1250
      %v1266 = vpack.c.b16 %v1253, %v1252
      %v1267 = vpack.c.b16 %v1255, %v1254
      %v1268 = vpack.c.b16 %v1257, %v1256
      %v1269 = vpack.c.b16 %v1259, %v1258
      %v1270 = vpack.c.b16 %v1261, %v1260
      %v1271 = vpack.c.b16 %v1263, %v1262
      %1280 = vmatpush.bf16.msra.mxu0 %v1271
      %1281 = vmatpush.bf16.msra.mxu0 %v1270
      %1282 = vmatpush.bf16.msra.mxu0 %v1269
      %1283 = vmatpush.bf16.msra.mxu0 %v1268
      %1284 = vmatpush.bf16.msra.mxu0 %v1267
      %1285 = vmatpush.bf16.msra.mxu0 %v1266
      %1286 = vmatpush.bf16.msra.mxu0 %v1265
      %1287 = vmatpush.bf16.msra.mxu0 %v1264
      %1288 = vmatmul.bf16.gmra.mxu0 %v1211
      %v1289 = vpop.f32.mrf.mxu0
      %v1290 = vadd.f32 0.0, %v1289
      %v1291 = vpop.f32.mrf.mxu0
      %v1292 = vadd.f32 0.0, %v1291
      %1293 = vmatmul.bf16.gmra.mxu0 %v1212
      %v1294 = vpop.f32.mrf.mxu0
      %v1295 = vadd.f32 0.0, %v1294
      %v1296 = vpop.f32.mrf.mxu0
      %v1297 = vadd.f32 0.0, %v1296
      %1298 = vmatmul.bf16.gmra.mxu0 %v1213
      %v1299 = vpop.f32.mrf.mxu0
      %v1300 = vadd.f32 0.0, %v1299
      %v1301 = vpop.f32.mrf.mxu0
      %v1302 = vadd.f32 0.0, %v1301
      %1303 = vmatmul.bf16.gmra.mxu0 %v1214
      %v1304 = vpop.f32.mrf.mxu0
      %v1305 = vadd.f32 0.0, %v1304
      %v1306 = vpop.f32.mrf.mxu0
      %v1307 = vadd.f32 0.0, %v1306
      %1308 = vdwg.mxu0
      %v1309 = vadd.f32 %v1194, %v1290
      %v1310 = vadd.f32 %v1195, %v1292
      %v1311 = vadd.f32 %v1196, %v1295
      %v1312 = vadd.f32 %v1197, %v1297
      %v1313 = vadd.f32 %v1198, %v1300
      %v1314 = vadd.f32 %v1199, %v1302
      %v1315 = vadd.f32 %v1200, %v1305
      %v1316 = vadd.f32 %v1201, %v1307
      %v1317 = vld [vmem:[%s1087 + $0x1] sm:$0xff]
      %v1318 = vld [vmem:[%s1087 + $0x11] sm:$0xff]
      %v1319 = vld [vmem:[%s1087 + $0x21] sm:$0xff]
      %v1320 = vld [vmem:[%s1087 + $0x31] sm:$0xff]
      %v1321 = vld [vmem:[%s1087 + $0x41] sm:$0xff]
      %v1322 = vld [vmem:[%s1087 + $0x51] sm:$0xff]
      %v1323 = vld [vmem:[%s1087 + $0x61] sm:$0xff]
      %v1324 = vld [vmem:[%s1087 + $0x71] sm:$0xff]
      %v1325 = vpack.c.bf16 %v1318, %v1317
      %v1326 = vpack.c.bf16 %v1320, %v1319
      %v1327 = vpack.c.bf16 %v1322, %v1321
      %v1328 = vpack.c.bf16 %v1324, %v1323
      %s1329 = scalar_lea.vmem %s4, 512
      %v1330 = vld [vmem:[%s1329] sm:$0xf]
      %v1331 = vld [vmem:[%s1329 + $0x4] sm:$0xf]
      %v1332 = vld [vmem:[%s1329 + $0x8] sm:$0xf]
      %v1333 = vld [vmem:[%s1329 + $0xc] sm:$0xf]
      %v1334 = vld [vmem:[%s1329 + $0x10] sm:$0xf]
      %v1335 = vld [vmem:[%s1329 + $0x14] sm:$0xf]
      %v1336 = vld [vmem:[%s1329 + $0x18] sm:$0xf]
      %v1337 = vld [vmem:[%s1329 + $0x1c] sm:$0xf]
      %v1338 = vld [vmem:[%s1329 + $0x20] sm:$0xf]
      %v1339 = vld [vmem:[%s1329 + $0x24] sm:$0xf]
      %v1340 = vld [vmem:[%s1329 + $0x28] sm:$0xf]
      %v1341 = vld [vmem:[%s1329 + $0x2c] sm:$0xf]
      %v1342 = vld [vmem:[%s1329 + $0x30] sm:$0xf]
      %v1343 = vld [vmem:[%s1329 + $0x34] sm:$0xf]
      %v1344 = vld [vmem:[%s1329 + $0x38] sm:$0xf]
      %v1345 = vld [vmem:[%s1329 + $0x3c] sm:$0xf]
      %v1362 = vunpack.c.l.b16 %v1330
      %v1363 = vunpack.c.l.b16 %v1331
      %v1364 = vunpack.c.l.b16 %v1332
      %v1365 = vunpack.c.l.b16 %v1333
      %v1366 = vunpack.c.l.b16 %v1334
      %v1367 = vunpack.c.l.b16 %v1335
      %v1368 = vunpack.c.l.b16 %v1336
      %v1369 = vunpack.c.l.b16 %v1337
      %v1370 = vunpack.c.l.b16 %v1338
      %v1371 = vunpack.c.l.b16 %v1339
      %v1372 = vunpack.c.l.b16 %v1340
      %v1373 = vunpack.c.l.b16 %v1341
      %v1374 = vunpack.c.l.b16 %v1342
      %v1375 = vunpack.c.l.b16 %v1343
      %v1376 = vunpack.c.l.b16 %v1344
      %v1377 = vunpack.c.l.b16 %v1345
      %v1378 = vpack.c.b16 %v1363, %v1362
      %v1379 = vpack.c.b16 %v1365, %v1364
      %v1380 = vpack.c.b16 %v1367, %v1366
      %v1381 = vpack.c.b16 %v1369, %v1368
      %v1382 = vpack.c.b16 %v1371, %v1370
      %v1383 = vpack.c.b16 %v1373, %v1372
      %v1384 = vpack.c.b16 %v1375, %v1374
      %v1385 = vpack.c.b16 %v1377, %v1376
      %1394 = vmatpush.bf16.msra.mxu0 %v1385
      %1395 = vmatpush.bf16.msra.mxu0 %v1384
      %1396 = vmatpush.bf16.msra.mxu0 %v1383
      %1397 = vmatpush.bf16.msra.mxu0 %v1382
      %1398 = vmatpush.bf16.msra.mxu0 %v1381
      %1399 = vmatpush.bf16.msra.mxu0 %v1380
      %1400 = vmatpush.bf16.msra.mxu0 %v1379
      %1401 = vmatpush.bf16.msra.mxu0 %v1378
      %1402 = vmatmul.bf16.gmra.mxu0 %v1325
      %v1403 = vpop.f32.mrf.mxu0
      %v1404 = vadd.f32 0.0, %v1403
      %v1405 = vpop.f32.mrf.mxu0
      %v1406 = vadd.f32 0.0, %v1405
      %1407 = vmatmul.bf16.gmra.mxu0 %v1326
      %v1408 = vpop.f32.mrf.mxu0
      %v1409 = vadd.f32 0.0, %v1408
      %v1410 = vpop.f32.mrf.mxu0
      %v1411 = vadd.f32 0.0, %v1410
      %1412 = vmatmul.bf16.gmra.mxu0 %v1327
      %v1413 = vpop.f32.mrf.mxu0
      %v1414 = vadd.f32 0.0, %v1413
      %v1415 = vpop.f32.mrf.mxu0
      %v1416 = vadd.f32 0.0, %v1415
      %1417 = vmatmul.bf16.gmra.mxu0 %v1328
      %v1418 = vpop.f32.mrf.mxu0
      %v1419 = vadd.f32 0.0, %v1418
      %v1420 = vpop.f32.mrf.mxu0
      %v1421 = vadd.f32 0.0, %v1420
      %1422 = vdwg.mxu0
      %v1423 = vadd.f32 %v1309, %v1404
      %v1424 = vadd.f32 %v1310, %v1406
      %v1425 = vadd.f32 %v1311, %v1409
      %v1426 = vadd.f32 %v1312, %v1411
      %v1427 = vadd.f32 %v1313, %v1414
      %v1428 = vadd.f32 %v1314, %v1416
      %v1429 = vadd.f32 %v1315, %v1419
      %v1430 = vadd.f32 %v1316, %v1421
      %v1431 = vld [vmem:[%s5] sm:$0x1]
      %v1433 = vperm.slane %v1431, 0
      %v1435 = vadd.f32 %v1423, %v1433
      %v1436 = vadd.f32 %v1424, %v1433
      %v1437 = vadd.f32 %v1425, %v1433
      %v1438 = vadd.f32 %v1426, %v1433
      %v1439 = vadd.f32 %v1427, %v1433
      %v1440 = vadd.f32 %v1428, %v1433
      %v1441 = vadd.f32 %v1429, %v1433
      %v1442 = vadd.f32 %v1430, %v1433
      %v1443 = vmax.f32 %v1435, 0.0
      %v1444 = vmax.f32 %v1436, 0.0
      %v1445 = vmax.f32 %v1437, 0.0
      %v1446 = vmax.f32 %v1438, 0.0
      %v1447 = vmax.f32 %v1439, 0.0
      %v1448 = vmax.f32 %v1440, 0.0
      %v1449 = vmax.f32 %v1441, 0.0
      %v1450 = vmax.f32 %v1442, 0.0
      %1451 = vst [vmem:[#allocation2] sm:$0xff] 0.0
      %1452 = vst [vmem:[#allocation2 + $0x8] sm:$0x3] 0.0
      %1453 = vst [vmem:[#allocation2 + $0x10] sm:$0xff] 0.0
      %1454 = vst [vmem:[#allocation2 + $0x18] sm:$0x3] 0.0
      %1455 = vst [vmem:[#allocation2 + $0x20] sm:$0xff] 0.0
      %1456 = vst [vmem:[#allocation2 + $0x28] sm:$0x3] 0.0
      %1457 = vst [vmem:[#allocation2 + $0x30] sm:$0xff] 0.0
      %1458 = vst [vmem:[#allocation2 + $0x38] sm:$0x3] 0.0
      %1459 = vst [vmem:[#allocation2 + $0x40] sm:$0xff] 0.0
      %1460 = vst [vmem:[#allocation2 + $0x48] sm:$0x3] 0.0
      %1461 = vst [vmem:[#allocation2 + $0x50] sm:$0xff] 0.0
      %1462 = vst [vmem:[#allocation2 + $0x58] sm:$0x3] 0.0
      %1463 = vst [vmem:[#allocation2 + $0x60] sm:$0xff] 0.0
      %1464 = vst [vmem:[#allocation2 + $0x68] sm:$0x3] 0.0
      %1465 = vst [vmem:[#allocation2 + $0x70] sm:$0xff] 0.0
      %1466 = vst [vmem:[#allocation2 + $0x78] sm:$0x3] 0.0
      %1467 = vst [vmem:[#allocation2 + $0x80] sm:$0xff] 0.0
      %1468 = vst [vmem:[#allocation2 + $0x88] sm:$0x3] 0.0
      %1469 = vst [vmem:[#allocation2 + $0x90] sm:$0xff] 0.0
      %1470 = vst [vmem:[#allocation2 + $0x98] sm:$0x3] 0.0
      %s1471 = scalar_lea.vmem [#allocation2], 16
      %1472 = vst [vmem:[%s1471 + $0x1] sm:$0xff] %v1443
      %1473 = vst [vmem:[%s1471 + $0x11] sm:$0xff] %v1444
      %1474 = vst [vmem:[%s1471 + $0x21] sm:$0xff] %v1445
      %1475 = vst [vmem:[%s1471 + $0x31] sm:$0xff] %v1446
      %1476 = vst [vmem:[%s1471 + $0x41] sm:$0xff] %v1447
      %1477 = vst [vmem:[%s1471 + $0x51] sm:$0xff] %v1448
      %1478 = vst [vmem:[%s1471 + $0x61] sm:$0xff] %v1449
      %1479 = vst [vmem:[%s1471 + $0x71] sm:$0xff] %v1450
      %v1480 = vld [vmem:[#allocation2] sm:$0xff]
      %v1481 = vld [vmem:[#allocation2 + $0x10] sm:$0xff]
      %v1482 = vld [vmem:[#allocation2 + $0x20] sm:$0xff]
      %v1483 = vld [vmem:[#allocation2 + $0x30] sm:$0xff]
      %v1484 = vld [vmem:[#allocation2 + $0x40] sm:$0xff]
      %v1485 = vld [vmem:[#allocation2 + $0x50] sm:$0xff]
      %v1486 = vld [vmem:[#allocation2 + $0x60] sm:$0xff]
      %v1487 = vld [vmem:[#allocation2 + $0x70] sm:$0xff]
      %v1488 = vpack.c.bf16 %v1481, %v1480
      %v1489 = vpack.c.bf16 %v1483, %v1482
      %v1490 = vpack.c.bf16 %v1485, %v1484
      %v1491 = vpack.c.bf16 %v1487, %v1486
      %v1492 = vld [vmem:[%s6] sm:$0xf]
      %v1493 = vld [vmem:[%s6 + $0x4] sm:$0xf]
      %v1494 = vld [vmem:[%s6 + $0x8] sm:$0xf]
      %v1495 = vld [vmem:[%s6 + $0xc] sm:$0xf]
      %v1496 = vld [vmem:[%s6 + $0x10] sm:$0xf]
      %v1497 = vld [vmem:[%s6 + $0x14] sm:$0xf]
      %v1498 = vld [vmem:[%s6 + $0x18] sm:$0xf]
      %v1499 = vld [vmem:[%s6 + $0x1c] sm:$0xf]
      %v1500 = vld [vmem:[%s6 + $0x20] sm:$0xf]
      %v1501 = vld [vmem:[%s6 + $0x24] sm:$0xf]
      %v1502 = vld [vmem:[%s6 + $0x28] sm:$0xf]
      %v1503 = vld [vmem:[%s6 + $0x2c] sm:$0xf]
      %v1504 = vld [vmem:[%s6 + $0x30] sm:$0xf]
      %v1505 = vld [vmem:[%s6 + $0x34] sm:$0xf]
      %v1506 = vld [vmem:[%s6 + $0x38] sm:$0xf]
      %v1507 = vld [vmem:[%s6 + $0x3c] sm:$0xf]
      %v1508 = vld [vmem:[#allocation2 + $0x1] sm:$0xff]
      %v1509 = vld [vmem:[#allocation2 + $0x11] sm:$0xff]
      %v1510 = vld [vmem:[#allocation2 + $0x21] sm:$0xff]
      %v1511 = vld [vmem:[#allocation2 + $0x31] sm:$0xff]
      %v1512 = vld [vmem:[#allocation2 + $0x41] sm:$0xff]
      %v1513 = vld [vmem:[#allocation2 + $0x51] sm:$0xff]
      %v1514 = vld [vmem:[#allocation2 + $0x61] sm:$0xff]
      %v1515 = vld [vmem:[#allocation2 + $0x71] sm:$0xff]
      %v1516 = vpack.c.bf16 %v1509, %v1508
      %v1517 = vpack.c.bf16 %v1511, %v1510
      %v1518 = vpack.c.bf16 %v1513, %v1512
      %v1519 = vpack.c.bf16 %v1515, %v1514
      %s1520 = scalar_lea.vmem %s6, 64
      %v1521 = vld [vmem:[%s1520] sm:$0xf]
      %v1522 = vld [vmem:[%s1520 + $0x4] sm:$0xf]
      %v1523 = vld [vmem:[%s1520 + $0x8] sm:$0xf]
      %v1524 = vld [vmem:[%s1520 + $0xc] sm:$0xf]
      %v1525 = vld [vmem:[%s1520 + $0x10] sm:$0xf]
      %v1526 = vld [vmem:[%s1520 + $0x14] sm:$0xf]
      %v1527 = vld [vmem:[%s1520 + $0x18] sm:$0xf]
      %v1528 = vld [vmem:[%s1520 + $0x1c] sm:$0xf]
      %v1529 = vld [vmem:[%s1520 + $0x20] sm:$0xf]
      %v1530 = vld [vmem:[%s1520 + $0x24] sm:$0xf]
      %v1531 = vld [vmem:[%s1520 + $0x28] sm:$0xf]
      %v1532 = vld [vmem:[%s1520 + $0x2c] sm:$0xf]
      %v1533 = vld [vmem:[%s1520 + $0x30] sm:$0xf]
      %v1534 = vld [vmem:[%s1520 + $0x34] sm:$0xf]
      %v1535 = vld [vmem:[%s1520 + $0x38] sm:$0xf]
      %v1536 = vld [vmem:[%s1520 + $0x3c] sm:$0xf]
      %v1553 = vunpack.c.l.b16 %v1521
      %v1554 = vunpack.c.l.b16 %v1522
      %v1555 = vunpack.c.l.b16 %v1523
      %v1556 = vunpack.c.l.b16 %v1524
      %v1557 = vunpack.c.l.b16 %v1525
      %v1558 = vunpack.c.l.b16 %v1526
      %v1559 = vunpack.c.l.b16 %v1527
      %v1560 = vunpack.c.l.b16 %v1528
      %v1561 = vunpack.c.l.b16 %v1529
      %v1562 = vunpack.c.l.b16 %v1530
      %v1563 = vunpack.c.l.b16 %v1531
      %v1564 = vunpack.c.l.b16 %v1532
      %v1565 = vunpack.c.l.b16 %v1533
      %v1566 = vunpack.c.l.b16 %v1534
      %v1567 = vunpack.c.l.b16 %v1535
      %v1568 = vunpack.c.l.b16 %v1536
      %v1569 = vpack.c.b16 %v1554, %v1553
      %v1570 = vpack.c.b16 %v1556, %v1555
      %v1571 = vpack.c.b16 %v1558, %v1557
      %v1572 = vpack.c.b16 %v1560, %v1559
      %v1573 = vpack.c.b16 %v1562, %v1561
      %v1574 = vpack.c.b16 %v1564, %v1563
      %v1575 = vpack.c.b16 %v1566, %v1565
      %v1576 = vpack.c.b16 %v1568, %v1567
      %1585 = vmatpush.bf16.msra.mxu0 %v1576
      %1586 = vmatpush.bf16.msra.mxu0 %v1575
      %1587 = vmatpush.bf16.msra.mxu0 %v1574
      %1588 = vmatpush.bf16.msra.mxu0 %v1573
      %1589 = vmatpush.bf16.msra.mxu0 %v1572
      %1590 = vmatpush.bf16.msra.mxu0 %v1571
      %1591 = vmatpush.bf16.msra.mxu0 %v1570
      %1592 = vmatpush.bf16.msra.mxu0 %v1569
      %1593 = vmatmul.bf16.gmra.mxu0 %v1516
      %v1594 = vpop.f32.mrf.mxu0
      %v1595 = vadd.f32 0.0, %v1594
      %v1596 = vpop.f32.mrf.mxu0
      %v1597 = vadd.f32 0.0, %v1596
      %1598 = vmatmul.bf16.gmra.mxu0 %v1517
      %v1599 = vpop.f32.mrf.mxu0
      %v1600 = vadd.f32 0.0, %v1599
      %v1601 = vpop.f32.mrf.mxu0
      %v1602 = vadd.f32 0.0, %v1601
      %1603 = vmatmul.bf16.gmra.mxu0 %v1518
      %v1604 = vpop.f32.mrf.mxu0
      %v1605 = vadd.f32 0.0, %v1604
      %v1606 = vpop.f32.mrf.mxu0
      %v1607 = vadd.f32 0.0, %v1606
      %1608 = vmatmul.bf16.gmra.mxu0 %v1519
      %v1609 = vpop.f32.mrf.mxu0
      %v1610 = vadd.f32 0.0, %v1609
      %v1611 = vpop.f32.mrf.mxu0
      %v1612 = vadd.f32 0.0, %v1611
      %1613 = vdwg.mxu0
      %v1630 = vunpack.c.l.b16 %v1492
      %v1631 = vunpack.c.l.b16 %v1493
      %v1632 = vunpack.c.l.b16 %v1494
      %v1633 = vunpack.c.l.b16 %v1495
      %v1634 = vunpack.c.l.b16 %v1496
      %v1635 = vunpack.c.l.b16 %v1497
      %v1636 = vunpack.c.l.b16 %v1498
      %v1637 = vunpack.c.l.b16 %v1499
      %v1638 = vunpack.c.l.b16 %v1500
      %v1639 = vunpack.c.l.b16 %v1501
      %v1640 = vunpack.c.l.b16 %v1502
      %v1641 = vunpack.c.l.b16 %v1503
      %v1642 = vunpack.c.l.b16 %v1504
      %v1643 = vunpack.c.l.b16 %v1505
      %v1644 = vunpack.c.l.b16 %v1506
      %v1645 = vunpack.c.l.b16 %v1507
      %v1646 = vpack.c.b16 %v1631, %v1630
      %v1647 = vpack.c.b16 %v1633, %v1632
      %v1648 = vpack.c.b16 %v1635, %v1634
      %v1649 = vpack.c.b16 %v1637, %v1636
      %v1650 = vpack.c.b16 %v1639, %v1638
      %v1651 = vpack.c.b16 %v1641, %v1640
      %v1652 = vpack.c.b16 %v1643, %v1642
      %v1653 = vpack.c.b16 %v1645, %v1644
      %1662 = vmatpush.bf16.msra.mxu0 %v1653
      %1663 = vmatpush.bf16.msra.mxu0 %v1652
      %1664 = vmatpush.bf16.msra.mxu0 %v1651
      %1665 = vmatpush.bf16.msra.mxu0 %v1650
      %1666 = vmatpush.bf16.msra.mxu0 %v1649
      %1667 = vmatpush.bf16.msra.mxu0 %v1648
      %1668 = vmatpush.bf16.msra.mxu0 %v1647
      %1669 = vmatpush.bf16.msra.mxu0 %v1646
      %1670 = vmatmul.bf16.gmra.mxu0 %v1488
      %v1671 = vpop.f32.mrf.mxu0
      %v1672 = vadd.f32 %v1595, %v1671
      %v1673 = vpop.f32.mrf.mxu0
      %v1674 = vadd.f32 %v1597, %v1673
      %1675 = vmatmul.bf16.gmra.mxu0 %v1489
      %v1676 = vpop.f32.mrf.mxu0
      %v1677 = vadd.f32 %v1600, %v1676
      %v1678 = vpop.f32.mrf.mxu0
      %v1679 = vadd.f32 %v1602, %v1678
      %1680 = vmatmul.bf16.gmra.mxu0 %v1490
      %v1681 = vpop.f32.mrf.mxu0
      %v1682 = vadd.f32 %v1605, %v1681
      %v1683 = vpop.f32.mrf.mxu0
      %v1684 = vadd.f32 %v1607, %v1683
      %1685 = vmatmul.bf16.gmra.mxu0 %v1491
      %v1686 = vpop.f32.mrf.mxu0
      %v1687 = vadd.f32 %v1610, %v1686
      %v1688 = vpop.f32.mrf.mxu0
      %v1689 = vadd.f32 %v1612, %v1688
      %1690 = vdwg.mxu0
      %v1691 = vld [vmem:[#allocation2 + $0x2] sm:$0xff]
      %v1692 = vld [vmem:[#allocation2 + $0x12] sm:$0xff]
      %v1693 = vld [vmem:[#allocation2 + $0x22] sm:$0xff]
      %v1694 = vld [vmem:[#allocation2 + $0x32] sm:$0xff]
      %v1695 = vld [vmem:[#allocation2 + $0x42] sm:$0xff]
      %v1696 = vld [vmem:[#allocation2 + $0x52] sm:$0xff]
      %v1697 = vld [vmem:[#allocation2 + $0x62] sm:$0xff]
      %v1698 = vld [vmem:[#allocation2 + $0x72] sm:$0xff]
      %v1699 = vpack.c.bf16 %v1692, %v1691
      %v1700 = vpack.c.bf16 %v1694, %v1693
      %v1701 = vpack.c.bf16 %v1696, %v1695
      %v1702 = vpack.c.bf16 %v1698, %v1697
      %s1703 = scalar_lea.vmem %s6, 128
      %v1704 = vld [vmem:[%s1703] sm:$0xf]
      %v1705 = vld [vmem:[%s1703 + $0x4] sm:$0xf]
      %v1706 = vld [vmem:[%s1703 + $0x8] sm:$0xf]
      %v1707 = vld [vmem:[%s1703 + $0xc] sm:$0xf]
      %v1708 = vld [vmem:[%s1703 + $0x10] sm:$0xf]
      %v1709 = vld [vmem:[%s1703 + $0x14] sm:$0xf]
      %v1710 = vld [vmem:[%s1703 + $0x18] sm:$0xf]
      %v1711 = vld [vmem:[%s1703 + $0x1c] sm:$0xf]
      %v1712 = vld [vmem:[%s1703 + $0x20] sm:$0xf]
      %v1713 = vld [vmem:[%s1703 + $0x24] sm:$0xf]
      %v1714 = vld [vmem:[%s1703 + $0x28] sm:$0xf]
      %v1715 = vld [vmem:[%s1703 + $0x2c] sm:$0xf]
      %v1716 = vld [vmem:[%s1703 + $0x30] sm:$0xf]
      %v1717 = vld [vmem:[%s1703 + $0x34] sm:$0xf]
      %v1718 = vld [vmem:[%s1703 + $0x38] sm:$0xf]
      %v1719 = vld [vmem:[%s1703 + $0x3c] sm:$0xf]
      %v1736 = vunpack.c.l.b16 %v1704
      %v1737 = vunpack.c.l.b16 %v1705
      %v1738 = vunpack.c.l.b16 %v1706
      %v1739 = vunpack.c.l.b16 %v1707
      %v1740 = vunpack.c.l.b16 %v1708
      %v1741 = vunpack.c.l.b16 %v1709
      %v1742 = vunpack.c.l.b16 %v1710
      %v1743 = vunpack.c.l.b16 %v1711
      %v1744 = vunpack.c.l.b16 %v1712
      %v1745 = vunpack.c.l.b16 %v1713
      %v1746 = vunpack.c.l.b16 %v1714
      %v1747 = vunpack.c.l.b16 %v1715
      %v1748 = vunpack.c.l.b16 %v1716
      %v1749 = vunpack.c.l.b16 %v1717
      %v1750 = vunpack.c.l.b16 %v1718
      %v1751 = vunpack.c.l.b16 %v1719
      %v1752 = vpack.c.b16 %v1737, %v1736
      %v1753 = vpack.c.b16 %v1739, %v1738
      %v1754 = vpack.c.b16 %v1741, %v1740
      %v1755 = vpack.c.b16 %v1743, %v1742
      %v1756 = vpack.c.b16 %v1745, %v1744
      %v1757 = vpack.c.b16 %v1747, %v1746
      %v1758 = vpack.c.b16 %v1749, %v1748
      %v1759 = vpack.c.b16 %v1751, %v1750
      %1768 = vmatpush.bf16.msra.mxu0 %v1759
      %1769 = vmatpush.bf16.msra.mxu0 %v1758
      %1770 = vmatpush.bf16.msra.mxu0 %v1757
      %1771 = vmatpush.bf16.msra.mxu0 %v1756
      %1772 = vmatpush.bf16.msra.mxu0 %v1755
      %1773 = vmatpush.bf16.msra.mxu0 %v1754
      %1774 = vmatpush.bf16.msra.mxu0 %v1753
      %1775 = vmatpush.bf16.msra.mxu0 %v1752
      %1776 = vmatmul.bf16.gmra.mxu0 %v1699
      %v1777 = vpop.f32.mrf.mxu0
      %v1778 = vadd.f32 0.0, %v1777
      %v1779 = vpop.f32.mrf.mxu0
      %v1780 = vadd.f32 0.0, %v1779
      %1781 = vmatmul.bf16.gmra.mxu0 %v1700
      %v1782 = vpop.f32.mrf.mxu0
      %v1783 = vadd.f32 0.0, %v1782
      %v1784 = vpop.f32.mrf.mxu0
      %v1785 = vadd.f32 0.0, %v1784
      %1786 = vmatmul.bf16.gmra.mxu0 %v1701
      %v1787 = vpop.f32.mrf.mxu0
      %v1788 = vadd.f32 0.0, %v1787
      %v1789 = vpop.f32.mrf.mxu0
      %v1790 = vadd.f32 0.0, %v1789
      %1791 = vmatmul.bf16.gmra.mxu0 %v1702
      %v1792 = vpop.f32.mrf.mxu0
      %v1793 = vadd.f32 0.0, %v1792
      %v1794 = vpop.f32.mrf.mxu0
      %v1795 = vadd.f32 0.0, %v1794
      %1796 = vdwg.mxu0
      %v1797 = vadd.f32 %v1672, %v1778
      %v1798 = vadd.f32 %v1674, %v1780
      %v1799 = vadd.f32 %v1677, %v1783
      %v1800 = vadd.f32 %v1679, %v1785
      %v1801 = vadd.f32 %v1682, %v1788
      %v1802 = vadd.f32 %v1684, %v1790
      %v1803 = vadd.f32 %v1687, %v1793
      %v1804 = vadd.f32 %v1689, %v1795
      %v1805 = vld [vmem:[%s1471] sm:$0xff]
      %v1806 = vld [vmem:[%s1471 + $0x10] sm:$0xff]
      %v1807 = vld [vmem:[%s1471 + $0x20] sm:$0xff]
      %v1808 = vld [vmem:[%s1471 + $0x30] sm:$0xff]
      %v1809 = vld [vmem:[%s1471 + $0x40] sm:$0xff]
      %v1810 = vld [vmem:[%s1471 + $0x50] sm:$0xff]
      %v1811 = vld [vmem:[%s1471 + $0x60] sm:$0xff]
      %v1812 = vld [vmem:[%s1471 + $0x70] sm:$0xff]
      %v1813 = vpack.c.bf16 %v1806, %v1805
      %v1814 = vpack.c.bf16 %v1808, %v1807
      %v1815 = vpack.c.bf16 %v1810, %v1809
      %v1816 = vpack.c.bf16 %v1812, %v1811
      %s1817 = scalar_lea.vmem %s6, 192
      %v1818 = vld [vmem:[%s1817] sm:$0xf]
      %v1819 = vld [vmem:[%s1817 + $0x4] sm:$0xf]
      %v1820 = vld [vmem:[%s1817 + $0x8] sm:$0xf]
      %v1821 = vld [vmem:[%s1817 + $0xc] sm:$0xf]
      %v1822 = vld [vmem:[%s1817 + $0x10] sm:$0xf]
      %v1823 = vld [vmem:[%s1817 + $0x14] sm:$0xf]
      %v1824 = vld [vmem:[%s1817 + $0x18] sm:$0xf]
      %v1825 = vld [vmem:[%s1817 + $0x1c] sm:$0xf]
      %v1826 = vld [vmem:[%s1817 + $0x20] sm:$0xf]
      %v1827 = vld [vmem:[%s1817 + $0x24] sm:$0xf]
      %v1828 = vld [vmem:[%s1817 + $0x28] sm:$0xf]
      %v1829 = vld [vmem:[%s1817 + $0x2c] sm:$0xf]
      %v1830 = vld [vmem:[%s1817 + $0x30] sm:$0xf]
      %v1831 = vld [vmem:[%s1817 + $0x34] sm:$0xf]
      %v1832 = vld [vmem:[%s1817 + $0x38] sm:$0xf]
      %v1833 = vld [vmem:[%s1817 + $0x3c] sm:$0xf]
      %v1850 = vunpack.c.l.b16 %v1818
      %v1851 = vunpack.c.l.b16 %v1819
      %v1852 = vunpack.c.l.b16 %v1820
      %v1853 = vunpack.c.l.b16 %v1821
      %v1854 = vunpack.c.l.b16 %v1822
      %v1855 = vunpack.c.l.b16 %v1823
      %v1856 = vunpack.c.l.b16 %v1824
      %v1857 = vunpack.c.l.b16 %v1825
      %v1858 = vunpack.c.l.b16 %v1826
      %v1859 = vunpack.c.l.b16 %v1827
      %v1860 = vunpack.c.l.b16 %v1828
      %v1861 = vunpack.c.l.b16 %v1829
      %v1862 = vunpack.c.l.b16 %v1830
      %v1863 = vunpack.c.l.b16 %v1831
      %v1864 = vunpack.c.l.b16 %v1832
      %v1865 = vunpack.c.l.b16 %v1833
      %v1866 = vpack.c.b16 %v1851, %v1850
      %v1867 = vpack.c.b16 %v1853, %v1852
      %v1868 = vpack.c.b16 %v1855, %v1854
      %v1869 = vpack.c.b16 %v1857, %v1856
      %v1870 = vpack.c.b16 %v1859, %v1858
      %v1871 = vpack.c.b16 %v1861, %v1860
      %v1872 = vpack.c.b16 %v1863, %v1862
      %v1873 = vpack.c.b16 %v1865, %v1864
      %1882 = vmatpush.bf16.msra.mxu0 %v1873
      %1883 = vmatpush.bf16.msra.mxu0 %v1872
      %1884 = vmatpush.bf16.msra.mxu0 %v1871
      %1885 = vmatpush.bf16.msra.mxu0 %v1870
      %1886 = vmatpush.bf16.msra.mxu0 %v1869
      %1887 = vmatpush.bf16.msra.mxu0 %v1868
      %1888 = vmatpush.bf16.msra.mxu0 %v1867
      %1889 = vmatpush.bf16.msra.mxu0 %v1866
      %1890 = vmatmul.bf16.gmra.mxu0 %v1813
      %v1891 = vpop.f32.mrf.mxu0
      %v1892 = vadd.f32 0.0, %v1891
      %v1893 = vpop.f32.mrf.mxu0
      %v1894 = vadd.f32 0.0, %v1893
      %1895 = vmatmul.bf16.gmra.mxu0 %v1814
      %v1896 = vpop.f32.mrf.mxu0
      %v1897 = vadd.f32 0.0, %v1896
      %v1898 = vpop.f32.mrf.mxu0
      %v1899 = vadd.f32 0.0, %v1898
      %1900 = vmatmul.bf16.gmra.mxu0 %v1815
      %v1901 = vpop.f32.mrf.mxu0
      %v1902 = vadd.f32 0.0, %v1901
      %v1903 = vpop.f32.mrf.mxu0
      %v1904 = vadd.f32 0.0, %v1903
      %1905 = vmatmul.bf16.gmra.mxu0 %v1816
      %v1906 = vpop.f32.mrf.mxu0
      %v1907 = vadd.f32 0.0, %v1906
      %v1908 = vpop.f32.mrf.mxu0
      %v1909 = vadd.f32 0.0, %v1908
      %1910 = vdwg.mxu0
      %v1911 = vadd.f32 %v1797, %v1892
      %v1912 = vadd.f32 %v1798, %v1894
      %v1913 = vadd.f32 %v1799, %v1897
      %v1914 = vadd.f32 %v1800, %v1899
      %v1915 = vadd.f32 %v1801, %v1902
      %v1916 = vadd.f32 %v1802, %v1904
      %v1917 = vadd.f32 %v1803, %v1907
      %v1918 = vadd.f32 %v1804, %v1909
      %v1919 = vld [vmem:[%s1471 + $0x1] sm:$0xff]
      %v1920 = vld [vmem:[%s1471 + $0x11] sm:$0xff]
      %v1921 = vld [vmem:[%s1471 + $0x21] sm:$0xff]
      %v1922 = vld [vmem:[%s1471 + $0x31] sm:$0xff]
      %v1923 = vld [vmem:[%s1471 + $0x41] sm:$0xff]
      %v1924 = vld [vmem:[%s1471 + $0x51] sm:$0xff]
      %v1925 = vld [vmem:[%s1471 + $0x61] sm:$0xff]
      %v1926 = vld [vmem:[%s1471 + $0x71] sm:$0xff]
      %v1927 = vpack.c.bf16 %v1920, %v1919
      %v1928 = vpack.c.bf16 %v1922, %v1921
      %v1929 = vpack.c.bf16 %v1924, %v1923
      %v1930 = vpack.c.bf16 %v1926, %v1925
      %s1931 = scalar_lea.vmem %s6, 256
      %v1932 = vld [vmem:[%s1931] sm:$0xf]
      %v1933 = vld [vmem:[%s1931 + $0x4] sm:$0xf]
      %v1934 = vld [vmem:[%s1931 + $0x8] sm:$0xf]
      %v1935 = vld [vmem:[%s1931 + $0xc] sm:$0xf]
      %v1936 = vld [vmem:[%s1931 + $0x10] sm:$0xf]
      %v1937 = vld [vmem:[%s1931 + $0x14] sm:$0xf]
      %v1938 = vld [vmem:[%s1931 + $0x18] sm:$0xf]
      %v1939 = vld [vmem:[%s1931 + $0x1c] sm:$0xf]
      %v1940 = vld [vmem:[%s1931 + $0x20] sm:$0xf]
      %v1941 = vld [vmem:[%s1931 + $0x24] sm:$0xf]
      %v1942 = vld [vmem:[%s1931 + $0x28] sm:$0xf]
      %v1943 = vld [vmem:[%s1931 + $0x2c] sm:$0xf]
      %v1944 = vld [vmem:[%s1931 + $0x30] sm:$0xf]
      %v1945 = vld [vmem:[%s1931 + $0x34] sm:$0xf]
      %v1946 = vld [vmem:[%s1931 + $0x38] sm:$0xf]
      %v1947 = vld [vmem:[%s1931 + $0x3c] sm:$0xf]
      %v1964 = vunpack.c.l.b16 %v1932
      %v1965 = vunpack.c.l.b16 %v1933
      %v1966 = vunpack.c.l.b16 %v1934
      %v1967 = vunpack.c.l.b16 %v1935
      %v1968 = vunpack.c.l.b16 %v1936
      %v1969 = vunpack.c.l.b16 %v1937
      %v1970 = vunpack.c.l.b16 %v1938
      %v1971 = vunpack.c.l.b16 %v1939
      %v1972 = vunpack.c.l.b16 %v1940
      %v1973 = vunpack.c.l.b16 %v1941
      %v1974 = vunpack.c.l.b16 %v1942
      %v1975 = vunpack.c.l.b16 %v1943
      %v1976 = vunpack.c.l.b16 %v1944
      %v1977 = vunpack.c.l.b16 %v1945
      %v1978 = vunpack.c.l.b16 %v1946
      %v1979 = vunpack.c.l.b16 %v1947
      %v1980 = vpack.c.b16 %v1965, %v1964
      %v1981 = vpack.c.b16 %v1967, %v1966
      %v1982 = vpack.c.b16 %v1969, %v1968
      %v1983 = vpack.c.b16 %v1971, %v1970
      %v1984 = vpack.c.b16 %v1973, %v1972
      %v1985 = vpack.c.b16 %v1975, %v1974
      %v1986 = vpack.c.b16 %v1977, %v1976
      %v1987 = vpack.c.b16 %v1979, %v1978
      %1996 = vmatpush.bf16.msra.mxu0 %v1987
      %1997 = vmatpush.bf16.msra.mxu0 %v1986
      %1998 = vmatpush.bf16.msra.mxu0 %v1985
      %1999 = vmatpush.bf16.msra.mxu0 %v1984
      %2000 = vmatpush.bf16.msra.mxu0 %v1983
      %2001 = vmatpush.bf16.msra.mxu0 %v1982
      %2002 = vmatpush.bf16.msra.mxu0 %v1981
      %2003 = vmatpush.bf16.msra.mxu0 %v1980
      %2004 = vmatmul.bf16.gmra.mxu0 %v1927
      %v2005 = vpop.f32.mrf.mxu0
      %v2006 = vadd.f32 0.0, %v2005
      %v2007 = vpop.f32.mrf.mxu0
      %v2008 = vadd.f32 0.0, %v2007
      %2009 = vmatmul.bf16.gmra.mxu0 %v1928
      %v2010 = vpop.f32.mrf.mxu0
      %v2011 = vadd.f32 0.0, %v2010
      %v2012 = vpop.f32.mrf.mxu0
      %v2013 = vadd.f32 0.0, %v2012
      %2014 = vmatmul.bf16.gmra.mxu0 %v1929
      %v2015 = vpop.f32.mrf.mxu0
      %v2016 = vadd.f32 0.0, %v2015
      %v2017 = vpop.f32.mrf.mxu0
      %v2018 = vadd.f32 0.0, %v2017
      %2019 = vmatmul.bf16.gmra.mxu0 %v1930
      %v2020 = vpop.f32.mrf.mxu0
      %v2021 = vadd.f32 0.0, %v2020
      %v2022 = vpop.f32.mrf.mxu0
      %v2023 = vadd.f32 0.0, %v2022
      %2024 = vdwg.mxu0
      %v2025 = vadd.f32 %v1911, %v2006
      %v2026 = vadd.f32 %v1912, %v2008
      %v2027 = vadd.f32 %v1913, %v2011
      %v2028 = vadd.f32 %v1914, %v2013
      %v2029 = vadd.f32 %v1915, %v2016
      %v2030 = vadd.f32 %v1916, %v2018
      %v2031 = vadd.f32 %v1917, %v2021
      %v2032 = vadd.f32 %v1918, %v2023
      %v2033 = vld [vmem:[%s1471 + $0x2] sm:$0xff]
      %v2034 = vld [vmem:[%s1471 + $0x12] sm:$0xff]
      %v2035 = vld [vmem:[%s1471 + $0x22] sm:$0xff]
      %v2036 = vld [vmem:[%s1471 + $0x32] sm:$0xff]
      %v2037 = vld [vmem:[%s1471 + $0x42] sm:$0xff]
      %v2038 = vld [vmem:[%s1471 + $0x52] sm:$0xff]
      %v2039 = vld [vmem:[%s1471 + $0x62] sm:$0xff]
      %v2040 = vld [vmem:[%s1471 + $0x72] sm:$0xff]
      %v2041 = vpack.c.bf16 %v2034, %v2033
      %v2042 = vpack.c.bf16 %v2036, %v2035
      %v2043 = vpack.c.bf16 %v2038, %v2037
      %v2044 = vpack.c.bf16 %v2040, %v2039
      %s2045 = scalar_lea.vmem %s6, 320
      %v2046 = vld [vmem:[%s2045] sm:$0xf]
      %v2047 = vld [vmem:[%s2045 + $0x4] sm:$0xf]
      %v2048 = vld [vmem:[%s2045 + $0x8] sm:$0xf]
      %v2049 = vld [vmem:[%s2045 + $0xc] sm:$0xf]
      %v2050 = vld [vmem:[%s2045 + $0x10] sm:$0xf]
      %v2051 = vld [vmem:[%s2045 + $0x14] sm:$0xf]
      %v2052 = vld [vmem:[%s2045 + $0x18] sm:$0xf]
      %v2053 = vld [vmem:[%s2045 + $0x1c] sm:$0xf]
      %v2054 = vld [vmem:[%s2045 + $0x20] sm:$0xf]
      %v2055 = vld [vmem:[%s2045 + $0x24] sm:$0xf]
      %v2056 = vld [vmem:[%s2045 + $0x28] sm:$0xf]
      %v2057 = vld [vmem:[%s2045 + $0x2c] sm:$0xf]
      %v2058 = vld [vmem:[%s2045 + $0x30] sm:$0xf]
      %v2059 = vld [vmem:[%s2045 + $0x34] sm:$0xf]
      %v2060 = vld [vmem:[%s2045 + $0x38] sm:$0xf]
      %v2061 = vld [vmem:[%s2045 + $0x3c] sm:$0xf]
      %v2078 = vunpack.c.l.b16 %v2046
      %v2079 = vunpack.c.l.b16 %v2047
      %v2080 = vunpack.c.l.b16 %v2048
      %v2081 = vunpack.c.l.b16 %v2049
      %v2082 = vunpack.c.l.b16 %v2050
      %v2083 = vunpack.c.l.b16 %v2051
      %v2084 = vunpack.c.l.b16 %v2052
      %v2085 = vunpack.c.l.b16 %v2053
      %v2086 = vunpack.c.l.b16 %v2054
      %v2087 = vunpack.c.l.b16 %v2055
      %v2088 = vunpack.c.l.b16 %v2056
      %v2089 = vunpack.c.l.b16 %v2057
      %v2090 = vunpack.c.l.b16 %v2058
      %v2091 = vunpack.c.l.b16 %v2059
      %v2092 = vunpack.c.l.b16 %v2060
      %v2093 = vunpack.c.l.b16 %v2061
      %v2094 = vpack.c.b16 %v2079, %v2078
      %v2095 = vpack.c.b16 %v2081, %v2080
      %v2096 = vpack.c.b16 %v2083, %v2082
      %v2097 = vpack.c.b16 %v2085, %v2084
      %v2098 = vpack.c.b16 %v2087, %v2086
      %v2099 = vpack.c.b16 %v2089, %v2088
      %v2100 = vpack.c.b16 %v2091, %v2090
      %v2101 = vpack.c.b16 %v2093, %v2092
      %2110 = vmatpush.bf16.msra.mxu0 %v2101
      %2111 = vmatpush.bf16.msra.mxu0 %v2100
      %2112 = vmatpush.bf16.msra.mxu0 %v2099
      %2113 = vmatpush.bf16.msra.mxu0 %v2098
      %2114 = vmatpush.bf16.msra.mxu0 %v2097
      %2115 = vmatpush.bf16.msra.mxu0 %v2096
      %2116 = vmatpush.bf16.msra.mxu0 %v2095
      %2117 = vmatpush.bf16.msra.mxu0 %v2094
      %2118 = vmatmul.bf16.gmra.mxu0 %v2041
      %v2119 = vpop.f32.mrf.mxu0
      %v2120 = vadd.f32 0.0, %v2119
      %v2121 = vpop.f32.mrf.mxu0
      %v2122 = vadd.f32 0.0, %v2121
      %2123 = vmatmul.bf16.gmra.mxu0 %v2042
      %v2124 = vpop.f32.mrf.mxu0
      %v2125 = vadd.f32 0.0, %v2124
      %v2126 = vpop.f32.mrf.mxu0
      %v2127 = vadd.f32 0.0, %v2126
      %2128 = vmatmul.bf16.gmra.mxu0 %v2043
      %v2129 = vpop.f32.mrf.mxu0
      %v2130 = vadd.f32 0.0, %v2129
      %v2131 = vpop.f32.mrf.mxu0
      %v2132 = vadd.f32 0.0, %v2131
      %2133 = vmatmul.bf16.gmra.mxu0 %v2044
      %v2134 = vpop.f32.mrf.mxu0
      %v2135 = vadd.f32 0.0, %v2134
      %v2136 = vpop.f32.mrf.mxu0
      %v2137 = vadd.f32 0.0, %v2136
      %2138 = vdwg.mxu0
      %v2139 = vadd.f32 %v2025, %v2120
      %v2140 = vadd.f32 %v2026, %v2122
      %v2141 = vadd.f32 %v2027, %v2125
      %v2142 = vadd.f32 %v2028, %v2127
      %v2143 = vadd.f32 %v2029, %v2130
      %v2144 = vadd.f32 %v2030, %v2132
      %v2145 = vadd.f32 %v2031, %v2135
      %v2146 = vadd.f32 %v2032, %v2137
      %s2147 = scalar_lea.vmem [#allocation2], 32
      %v2148 = vld [vmem:[%s2147] sm:$0xff]
      %v2149 = vld [vmem:[%s2147 + $0x10] sm:$0xff]
      %v2150 = vld [vmem:[%s2147 + $0x20] sm:$0xff]
      %v2151 = vld [vmem:[%s2147 + $0x30] sm:$0xff]
      %v2152 = vld [vmem:[%s2147 + $0x40] sm:$0xff]
      %v2153 = vld [vmem:[%s2147 + $0x50] sm:$0xff]
      %v2154 = vld [vmem:[%s2147 + $0x60] sm:$0xff]
      %v2155 = vld [vmem:[%s2147 + $0x70] sm:$0xff]
      %v2156 = vpack.c.bf16 %v2149, %v2148
      %v2157 = vpack.c.bf16 %v2151, %v2150
      %v2158 = vpack.c.bf16 %v2153, %v2152
      %v2159 = vpack.c.bf16 %v2155, %v2154
      %s2160 = scalar_lea.vmem %s6, 384
      %v2161 = vld [vmem:[%s2160] sm:$0xf]
      %v2162 = vld [vmem:[%s2160 + $0x4] sm:$0xf]
      %v2163 = vld [vmem:[%s2160 + $0x8] sm:$0xf]
      %v2164 = vld [vmem:[%s2160 + $0xc] sm:$0xf]
      %v2165 = vld [vmem:[%s2160 + $0x10] sm:$0xf]
      %v2166 = vld [vmem:[%s2160 + $0x14] sm:$0xf]
      %v2167 = vld [vmem:[%s2160 + $0x18] sm:$0xf]
      %v2168 = vld [vmem:[%s2160 + $0x1c] sm:$0xf]
      %v2169 = vld [vmem:[%s2160 + $0x20] sm:$0xf]
      %v2170 = vld [vmem:[%s2160 + $0x24] sm:$0xf]
      %v2171 = vld [vmem:[%s2160 + $0x28] sm:$0xf]
      %v2172 = vld [vmem:[%s2160 + $0x2c] sm:$0xf]
      %v2173 = vld [vmem:[%s2160 + $0x30] sm:$0xf]
      %v2174 = vld [vmem:[%s2160 + $0x34] sm:$0xf]
      %v2175 = vld [vmem:[%s2160 + $0x38] sm:$0xf]
      %v2176 = vld [vmem:[%s2160 + $0x3c] sm:$0xf]
      %v2193 = vunpack.c.l.b16 %v2161
      %v2194 = vunpack.c.l.b16 %v2162
      %v2195 = vunpack.c.l.b16 %v2163
      %v2196 = vunpack.c.l.b16 %v2164
      %v2197 = vunpack.c.l.b16 %v2165
      %v2198 = vunpack.c.l.b16 %v2166
      %v2199 = vunpack.c.l.b16 %v2167
      %v2200 = vunpack.c.l.b16 %v2168
      %v2201 = vunpack.c.l.b16 %v2169
      %v2202 = vunpack.c.l.b16 %v2170
      %v2203 = vunpack.c.l.b16 %v2171
      %v2204 = vunpack.c.l.b16 %v2172
      %v2205 = vunpack.c.l.b16 %v2173
      %v2206 = vunpack.c.l.b16 %v2174
      %v2207 = vunpack.c.l.b16 %v2175
      %v2208 = vunpack.c.l.b16 %v2176
      %v2209 = vpack.c.b16 %v2194, %v2193
      %v2210 = vpack.c.b16 %v2196, %v2195
      %v2211 = vpack.c.b16 %v2198, %v2197
      %v2212 = vpack.c.b16 %v2200, %v2199
      %v2213 = vpack.c.b16 %v2202, %v2201
      %v2214 = vpack.c.b16 %v2204, %v2203
      %v2215 = vpack.c.b16 %v2206, %v2205
      %v2216 = vpack.c.b16 %v2208, %v2207
      %2225 = vmatpush.bf16.msra.mxu0 %v2216
      %2226 = vmatpush.bf16.msra.mxu0 %v2215
      %2227 = vmatpush.bf16.msra.mxu0 %v2214
      %2228 = vmatpush.bf16.msra.mxu0 %v2213
      %2229 = vmatpush.bf16.msra.mxu0 %v2212
      %2230 = vmatpush.bf16.msra.mxu0 %v2211
      %2231 = vmatpush.bf16.msra.mxu0 %v2210
      %2232 = vmatpush.bf16.msra.mxu0 %v2209
      %2233 = vmatmul.bf16.gmra.mxu0 %v2156
      %v2234 = vpop.f32.mrf.mxu0
      %v2235 = vadd.f32 0.0, %v2234
      %v2236 = vpop.f32.mrf.mxu0
      %v2237 = vadd.f32 0.0, %v2236
      %2238 = vmatmul.bf16.gmra.mxu0 %v2157
      %v2239 = vpop.f32.mrf.mxu0
      %v2240 = vadd.f32 0.0, %v2239
      %v2241 = vpop.f32.mrf.mxu0
      %v2242 = vadd.f32 0.0, %v2241
      %2243 = vmatmul.bf16.gmra.mxu0 %v2158
      %v2244 = vpop.f32.mrf.mxu0
      %v2245 = vadd.f32 0.0, %v2244
      %v2246 = vpop.f32.mrf.mxu0
      %v2247 = vadd.f32 0.0, %v2246
      %2248 = vmatmul.bf16.gmra.mxu0 %v2159
      %v2249 = vpop.f32.mrf.mxu0
      %v2250 = vadd.f32 0.0, %v2249
      %v2251 = vpop.f32.mrf.mxu0
      %v2252 = vadd.f32 0.0, %v2251
      %2253 = vdwg.mxu0
      %v2254 = vadd.f32 %v2139, %v2235
      %v2255 = vadd.f32 %v2140, %v2237
      %v2256 = vadd.f32 %v2141, %v2240
      %v2257 = vadd.f32 %v2142, %v2242
      %v2258 = vadd.f32 %v2143, %v2245
      %v2259 = vadd.f32 %v2144, %v2247
      %v2260 = vadd.f32 %v2145, %v2250
      %v2261 = vadd.f32 %v2146, %v2252
      %v2262 = vld [vmem:[%s2147 + $0x1] sm:$0xff]
      %v2263 = vld [vmem:[%s2147 + $0x11] sm:$0xff]
      %v2264 = vld [vmem:[%s2147 + $0x21] sm:$0xff]
      %v2265 = vld [vmem:[%s2147 + $0x31] sm:$0xff]
      %v2266 = vld [vmem:[%s2147 + $0x41] sm:$0xff]
      %v2267 = vld [vmem:[%s2147 + $0x51] sm:$0xff]
      %v2268 = vld [vmem:[%s2147 + $0x61] sm:$0xff]
      %v2269 = vld [vmem:[%s2147 + $0x71] sm:$0xff]
      %v2270 = vpack.c.bf16 %v2263, %v2262
      %v2271 = vpack.c.bf16 %v2265, %v2264
      %v2272 = vpack.c.bf16 %v2267, %v2266
      %v2273 = vpack.c.bf16 %v2269, %v2268
      %s2274 = scalar_lea.vmem %s6, 448
      %v2275 = vld [vmem:[%s2274] sm:$0xf]
      %v2276 = vld [vmem:[%s2274 + $0x4] sm:$0xf]
      %v2277 = vld [vmem:[%s2274 + $0x8] sm:$0xf]
      %v2278 = vld [vmem:[%s2274 + $0xc] sm:$0xf]
      %v2279 = vld [vmem:[%s2274 + $0x10] sm:$0xf]
      %v2280 = vld [vmem:[%s2274 + $0x14] sm:$0xf]
      %v2281 = vld [vmem:[%s2274 + $0x18] sm:$0xf]
      %v2282 = vld [vmem:[%s2274 + $0x1c] sm:$0xf]
      %v2283 = vld [vmem:[%s2274 + $0x20] sm:$0xf]
      %v2284 = vld [vmem:[%s2274 + $0x24] sm:$0xf]
      %v2285 = vld [vmem:[%s2274 + $0x28] sm:$0xf]
      %v2286 = vld [vmem:[%s2274 + $0x2c] sm:$0xf]
      %v2287 = vld [vmem:[%s2274 + $0x30] sm:$0xf]
      %v2288 = vld [vmem:[%s2274 + $0x34] sm:$0xf]
      %v2289 = vld [vmem:[%s2274 + $0x38] sm:$0xf]
      %v2290 = vld [vmem:[%s2274 + $0x3c] sm:$0xf]
      %v2307 = vunpack.c.l.b16 %v2275
      %v2308 = vunpack.c.l.b16 %v2276
      %v2309 = vunpack.c.l.b16 %v2277
      %v2310 = vunpack.c.l.b16 %v2278
      %v2311 = vunpack.c.l.b16 %v2279
      %v2312 = vunpack.c.l.b16 %v2280
      %v2313 = vunpack.c.l.b16 %v2281
      %v2314 = vunpack.c.l.b16 %v2282
      %v2315 = vunpack.c.l.b16 %v2283
      %v2316 = vunpack.c.l.b16 %v2284
      %v2317 = vunpack.c.l.b16 %v2285
      %v2318 = vunpack.c.l.b16 %v2286
      %v2319 = vunpack.c.l.b16 %v2287
      %v2320 = vunpack.c.l.b16 %v2288
      %v2321 = vunpack.c.l.b16 %v2289
      %v2322 = vunpack.c.l.b16 %v2290
      %v2323 = vpack.c.b16 %v2308, %v2307
      %v2324 = vpack.c.b16 %v2310, %v2309
      %v2325 = vpack.c.b16 %v2312, %v2311
      %v2326 = vpack.c.b16 %v2314, %v2313
      %v2327 = vpack.c.b16 %v2316, %v2315
      %v2328 = vpack.c.b16 %v2318, %v2317
      %v2329 = vpack.c.b16 %v2320, %v2319
      %v2330 = vpack.c.b16 %v2322, %v2321
      %2339 = vmatpush.bf16.msra.mxu0 %v2330
      %2340 = vmatpush.bf16.msra.mxu0 %v2329
      %2341 = vmatpush.bf16.msra.mxu0 %v2328
      %2342 = vmatpush.bf16.msra.mxu0 %v2327
      %2343 = vmatpush.bf16.msra.mxu0 %v2326
      %2344 = vmatpush.bf16.msra.mxu0 %v2325
      %2345 = vmatpush.bf16.msra.mxu0 %v2324
      %2346 = vmatpush.bf16.msra.mxu0 %v2323
      %2347 = vmatmul.bf16.gmra.mxu0 %v2270
      %v2348 = vpop.f32.mrf.mxu0
      %v2349 = vadd.f32 0.0, %v2348
      %v2350 = vpop.f32.mrf.mxu0
      %v2351 = vadd.f32 0.0, %v2350
      %2352 = vmatmul.bf16.gmra.mxu0 %v2271
      %v2353 = vpop.f32.mrf.mxu0
      %v2354 = vadd.f32 0.0, %v2353
      %v2355 = vpop.f32.mrf.mxu0
      %v2356 = vadd.f32 0.0, %v2355
      %2357 = vmatmul.bf16.gmra.mxu0 %v2272
      %v2358 = vpop.f32.mrf.mxu0
      %v2359 = vadd.f32 0.0, %v2358
      %v2360 = vpop.f32.mrf.mxu0
      %v2361 = vadd.f32 0.0, %v2360
      %2362 = vmatmul.bf16.gmra.mxu0 %v2273
      %v2363 = vpop.f32.mrf.mxu0
      %v2364 = vadd.f32 0.0, %v2363
      %v2365 = vpop.f32.mrf.mxu0
      %v2366 = vadd.f32 0.0, %v2365
      %2367 = vdwg.mxu0
      %v2368 = vadd.f32 %v2254, %v2349
      %v2369 = vadd.f32 %v2255, %v2351
      %v2370 = vadd.f32 %v2256, %v2354
      %v2371 = vadd.f32 %v2257, %v2356
      %v2372 = vadd.f32 %v2258, %v2359
      %v2373 = vadd.f32 %v2259, %v2361
      %v2374 = vadd.f32 %v2260, %v2364
      %v2375 = vadd.f32 %v2261, %v2366
      %v2376 = vld [vmem:[%s2147 + $0x2] sm:$0xff]
      %v2377 = vld [vmem:[%s2147 + $0x12] sm:$0xff]
      %v2378 = vld [vmem:[%s2147 + $0x22] sm:$0xff]
      %v2379 = vld [vmem:[%s2147 + $0x32] sm:$0xff]
      %v2380 = vld [vmem:[%s2147 + $0x42] sm:$0xff]
      %v2381 = vld [vmem:[%s2147 + $0x52] sm:$0xff]
      %v2382 = vld [vmem:[%s2147 + $0x62] sm:$0xff]
      %v2383 = vld [vmem:[%s2147 + $0x72] sm:$0xff]
      %v2384 = vpack.c.bf16 %v2377, %v2376
      %v2385 = vpack.c.bf16 %v2379, %v2378
      %v2386 = vpack.c.bf16 %v2381, %v2380
      %v2387 = vpack.c.bf16 %v2383, %v2382
      %s2388 = scalar_lea.vmem %s6, 512
      %v2389 = vld [vmem:[%s2388] sm:$0xf]
      %v2390 = vld [vmem:[%s2388 + $0x4] sm:$0xf]
      %v2391 = vld [vmem:[%s2388 + $0x8] sm:$0xf]
      %v2392 = vld [vmem:[%s2388 + $0xc] sm:$0xf]
      %v2393 = vld [vmem:[%s2388 + $0x10] sm:$0xf]
      %v2394 = vld [vmem:[%s2388 + $0x14] sm:$0xf]
      %v2395 = vld [vmem:[%s2388 + $0x18] sm:$0xf]
      %v2396 = vld [vmem:[%s2388 + $0x1c] sm:$0xf]
      %v2397 = vld [vmem:[%s2388 + $0x20] sm:$0xf]
      %v2398 = vld [vmem:[%s2388 + $0x24] sm:$0xf]
      %v2399 = vld [vmem:[%s2388 + $0x28] sm:$0xf]
      %v2400 = vld [vmem:[%s2388 + $0x2c] sm:$0xf]
      %v2401 = vld [vmem:[%s2388 + $0x30] sm:$0xf]
      %v2402 = vld [vmem:[%s2388 + $0x34] sm:$0xf]
      %v2403 = vld [vmem:[%s2388 + $0x38] sm:$0xf]
      %v2404 = vld [vmem:[%s2388 + $0x3c] sm:$0xf]
      %v2421 = vunpack.c.l.b16 %v2389
      %v2422 = vunpack.c.l.b16 %v2390
      %v2423 = vunpack.c.l.b16 %v2391
      %v2424 = vunpack.c.l.b16 %v2392
      %v2425 = vunpack.c.l.b16 %v2393
      %v2426 = vunpack.c.l.b16 %v2394
      %v2427 = vunpack.c.l.b16 %v2395
      %v2428 = vunpack.c.l.b16 %v2396
      %v2429 = vunpack.c.l.b16 %v2397
      %v2430 = vunpack.c.l.b16 %v2398
      %v2431 = vunpack.c.l.b16 %v2399
      %v2432 = vunpack.c.l.b16 %v2400
      %v2433 = vunpack.c.l.b16 %v2401
      %v2434 = vunpack.c.l.b16 %v2402
      %v2435 = vunpack.c.l.b16 %v2403
      %v2436 = vunpack.c.l.b16 %v2404
      %v2437 = vpack.c.b16 %v2422, %v2421
      %v2438 = vpack.c.b16 %v2424, %v2423
      %v2439 = vpack.c.b16 %v2426, %v2425
      %v2440 = vpack.c.b16 %v2428, %v2427
      %v2441 = vpack.c.b16 %v2430, %v2429
      %v2442 = vpack.c.b16 %v2432, %v2431
      %v2443 = vpack.c.b16 %v2434, %v2433
      %v2444 = vpack.c.b16 %v2436, %v2435
      %2453 = vmatpush.bf16.msra.mxu0 %v2444
      %2454 = vmatpush.bf16.msra.mxu0 %v2443
      %2455 = vmatpush.bf16.msra.mxu0 %v2442
      %2456 = vmatpush.bf16.msra.mxu0 %v2441
      %2457 = vmatpush.bf16.msra.mxu0 %v2440
      %2458 = vmatpush.bf16.msra.mxu0 %v2439
      %2459 = vmatpush.bf16.msra.mxu0 %v2438
      %2460 = vmatpush.bf16.msra.mxu0 %v2437
      %2461 = vmatmul.bf16.gmra.mxu0 %v2384
      %v2462 = vpop.f32.mrf.mxu0
      %v2463 = vadd.f32 0.0, %v2462
      %v2464 = vpop.f32.mrf.mxu0
      %v2465 = vadd.f32 0.0, %v2464
      %2466 = vmatmul.bf16.gmra.mxu0 %v2385
      %v2467 = vpop.f32.mrf.mxu0
      %v2468 = vadd.f32 0.0, %v2467
      %v2469 = vpop.f32.mrf.mxu0
      %v2470 = vadd.f32 0.0, %v2469
      %2471 = vmatmul.bf16.gmra.mxu0 %v2386
      %v2472 = vpop.f32.mrf.mxu0
      %v2473 = vadd.f32 0.0, %v2472
      %v2474 = vpop.f32.mrf.mxu0
      %v2475 = vadd.f32 0.0, %v2474
      %2476 = vmatmul.bf16.gmra.mxu0 %v2387
      %v2477 = vpop.f32.mrf.mxu0
      %v2478 = vadd.f32 0.0, %v2477
      %v2479 = vpop.f32.mrf.mxu0
      %v2480 = vadd.f32 0.0, %v2479
      %2481 = vdwg.mxu0
      %v2482 = vadd.f32 %v2368, %v2463
      %v2483 = vadd.f32 %v2369, %v2465
      %v2484 = vadd.f32 %v2370, %v2468
      %v2485 = vadd.f32 %v2371, %v2470
      %v2486 = vadd.f32 %v2372, %v2473
      %v2487 = vadd.f32 %v2373, %v2475
      %v2488 = vadd.f32 %v2374, %v2478
      %v2489 = vadd.f32 %v2375, %v2480
      %v2490 = vld [vmem:[%s7] sm:$0x1]
      %v2492 = vperm.slane %v2490, 0
      %v2494 = vadd.f32 %v2482, %v2492
      %v2495 = vadd.f32 %v2483, %v2492
      %v2496 = vadd.f32 %v2484, %v2492
      %v2497 = vadd.f32 %v2485, %v2492
      %v2498 = vadd.f32 %v2486, %v2492
      %v2499 = vadd.f32 %v2487, %v2492
      %v2500 = vadd.f32 %v2488, %v2492
      %v2501 = vadd.f32 %v2489, %v2492
      %v2502 = vld [vmem:[%s414] sm:$0xff]
      %v2503 = vld [vmem:[%s414 + $0x10] sm:$0xff]
      %v2504 = vld [vmem:[%s414 + $0x20] sm:$0xff]
      %v2505 = vld [vmem:[%s414 + $0x30] sm:$0xff]
      %v2506 = vld [vmem:[%s414 + $0x40] sm:$0xff]
      %v2507 = vld [vmem:[%s414 + $0x50] sm:$0xff]
      %v2508 = vld [vmem:[%s414 + $0x60] sm:$0xff]
      %v2509 = vld [vmem:[%s414 + $0x70] sm:$0xff]
      %v2510 = vpack.c.bf16 %v2503, %v2502
      %v2511 = vpack.c.bf16 %v2505, %v2504
      %v2512 = vpack.c.bf16 %v2507, %v2506
      %v2513 = vpack.c.bf16 %v2509, %v2508
      %v2514 = vld [vmem:[%s8] sm:$0xf]
      %v2515 = vld [vmem:[%s8 + $0x4] sm:$0xf]
      %v2516 = vld [vmem:[%s8 + $0x8] sm:$0xf]
      %v2517 = vld [vmem:[%s8 + $0xc] sm:$0xf]
      %v2518 = vld [vmem:[%s8 + $0x10] sm:$0xf]
      %v2519 = vld [vmem:[%s8 + $0x14] sm:$0xf]
      %v2520 = vld [vmem:[%s8 + $0x18] sm:$0xf]
      %v2521 = vld [vmem:[%s8 + $0x1c] sm:$0xf]
      %v2522 = vld [vmem:[%s8 + $0x20] sm:$0xf]
      %v2523 = vld [vmem:[%s8 + $0x24] sm:$0xf]
      %v2524 = vld [vmem:[%s8 + $0x28] sm:$0xf]
      %v2525 = vld [vmem:[%s8 + $0x2c] sm:$0xf]
      %v2526 = vld [vmem:[%s8 + $0x30] sm:$0xf]
      %v2527 = vld [vmem:[%s8 + $0x34] sm:$0xf]
      %v2528 = vld [vmem:[%s8 + $0x38] sm:$0xf]
      %v2529 = vld [vmem:[%s8 + $0x3c] sm:$0xf]
      %v2530 = vld [vmem:[%s9] sm:$0x1]
      %v2532 = vperm.slane %v2530, 0
      %v2550 = vunpack.c.l.b16 %v2514
      %v2551 = vunpack.c.l.b16 %v2515
      %v2552 = vunpack.c.l.b16 %v2516
      %v2553 = vunpack.c.l.b16 %v2517
      %v2554 = vunpack.c.l.b16 %v2518
      %v2555 = vunpack.c.l.b16 %v2519
      %v2556 = vunpack.c.l.b16 %v2520
      %v2557 = vunpack.c.l.b16 %v2521
      %v2558 = vunpack.c.l.b16 %v2522
      %v2559 = vunpack.c.l.b16 %v2523
      %v2560 = vunpack.c.l.b16 %v2524
      %v2561 = vunpack.c.l.b16 %v2525
      %v2562 = vunpack.c.l.b16 %v2526
      %v2563 = vunpack.c.l.b16 %v2527
      %v2564 = vunpack.c.l.b16 %v2528
      %v2565 = vunpack.c.l.b16 %v2529
      %v2566 = vpack.c.b16 %v2551, %v2550
      %v2567 = vpack.c.b16 %v2553, %v2552
      %v2568 = vpack.c.b16 %v2555, %v2554
      %v2569 = vpack.c.b16 %v2557, %v2556
      %v2570 = vpack.c.b16 %v2559, %v2558
      %v2571 = vpack.c.b16 %v2561, %v2560
      %v2572 = vpack.c.b16 %v2563, %v2562
      %v2573 = vpack.c.b16 %v2565, %v2564
      %2582 = vmatpush.bf16.msra.mxu0 %v2573
      %2583 = vmatpush.bf16.msra.mxu0 %v2572
      %2584 = vmatpush.bf16.msra.mxu0 %v2571
      %2585 = vmatpush.bf16.msra.mxu0 %v2570
      %2586 = vmatpush.bf16.msra.mxu0 %v2569
      %2587 = vmatpush.bf16.msra.mxu0 %v2568
      %2588 = vmatpush.bf16.msra.mxu0 %v2567
      %2589 = vmatpush.bf16.msra.mxu0 %v2566
      %2590 = vmatmul.bf16.gmra.mxu0 %v2510
      %v2591 = vpop.f32.mrf.mxu0
      %v2592 = vadd.f32 %v2532, %v2591
      %v2593 = vpop.f32.mrf.mxu0
      %v2594 = vadd.f32 %v2532, %v2593
      %2595 = vmatmul.bf16.gmra.mxu0 %v2511
      %v2596 = vpop.f32.mrf.mxu0
      %v2597 = vadd.f32 %v2532, %v2596
      %v2598 = vpop.f32.mrf.mxu0
      %v2599 = vadd.f32 %v2532, %v2598
      %2600 = vmatmul.bf16.gmra.mxu0 %v2512
      %v2601 = vpop.f32.mrf.mxu0
      %v2602 = vadd.f32 %v2532, %v2601
      %v2603 = vpop.f32.mrf.mxu0
      %v2604 = vadd.f32 %v2532, %v2603
      %2605 = vmatmul.bf16.gmra.mxu0 %v2513
      %v2606 = vpop.f32.mrf.mxu0
      %v2607 = vadd.f32 %v2532, %v2606
      %v2608 = vpop.f32.mrf.mxu0
      %v2609 = vadd.f32 %v2532, %v2608
      %2610 = vdwg.mxu0
      %v2611 = vadd.f32 %v2494, %v2592
      %v2612 = vadd.f32 %v2495, %v2594
      %v2613 = vadd.f32 %v2496, %v2597
      %v2614 = vadd.f32 %v2497, %v2599
      %v2615 = vadd.f32 %v2498, %v2602
      %v2616 = vadd.f32 %v2499, %v2604
      %v2617 = vadd.f32 %v2500, %v2607
      %v2618 = vadd.f32 %v2501, %v2609
      %v2619 = vmax.f32 %v2611, 0.0
      %v2620 = vmax.f32 %v2612, 0.0
      %v2621 = vmax.f32 %v2613, 0.0
      %v2622 = vmax.f32 %v2614, 0.0
      %v2623 = vmax.f32 %v2615, 0.0
      %v2624 = vmax.f32 %v2616, 0.0
      %v2625 = vmax.f32 %v2617, 0.0
      %v2626 = vmax.f32 %v2618, 0.0
      %2627 = vst [vmem:[%s419] sm:$0xff] %v2619
      %2628 = vst [vmem:[%s419 + $0x8] sm:$0xff] %v2620
      %2629 = vst [vmem:[%s419 + $0x10] sm:$0xff] %v2621
      %2630 = vst [vmem:[%s419 + $0x18] sm:$0xff] %v2622
      %2631 = vst [vmem:[%s419 + $0x20] sm:$0xff] %v2623
      %2632 = vst [vmem:[%s419 + $0x28] sm:$0xff] %v2624
      %2633 = vst [vmem:[%s419 + $0x30] sm:$0xff] %v2625
      %2634 = vst [vmem:[%s419 + $0x38] sm:$0xff] %v2626
      %p2635 = scmp.lt.s32.totalorder %s21, 1
      %s2636 = scalar_select %p2635, %s21, 1
      %s2637 = smul.addr %s2636, 8
      %s2638 = smul.addr %s2637, 8
      %s2639 = scalar_lea.vmem %s10, %s2638
      // Predicated region
      $region61: #{basic_block_forward.1} parent=59 // pred_check
        %p2640 = pneg %p269
      $region62: #{basic_block_forward.1} parent=59 // pred_check_branch
        %2642 = sbr.rel (%p2640) target = $region64
      $region63: #{basic_block_forward.1} parent=59 // pred_region
        _
      $region64: #{basic_block_forward.1} parent=59 // pred_fallthru
        _
    $region60: #{basic_block_forward.1} parent=5 // pred_fallthru
      _
    %p2643 = scmp.le.s32.totalorder 2, %s16
    // Predicated region
    $region65: #{basic_block_forward.1} parent=5 // pred_check
      %p2644 = pneg %p2643
    $region66: #{basic_block_forward.1} parent=5 // pred_check_branch
      %2646 = sbr.rel (%p2644) target = $region68
    $region67: #{basic_block_forward.1} parent=5 // pred_region
      %s2647 = ssub.s32 %s16, 2
      // Predicated region
      $region69: #{basic_block_forward.1} parent=67 // pred_check
        %p2648 = pneg %p275
      $region70: #{basic_block_forward.1} parent=67 // pred_check_branch
        %2650 = sbr.rel (%p2648) target = $region72
      $region71: #{basic_block_forward.1} parent=67 // pred_region
        %p2651 = scmp.lt.s32.totalorder %s22, 1
        %s2652 = scalar_select %p2651, %s22, 1
        %s2653 = smul.addr %s2652, 8
        %s2654 = smul.addr %s2653, 8
        %s2655 = scalar_lea.vmem %s10, %s2654
      $region72: #{basic_block_forward.1} parent=67 // pred_fallthru
        _
    $region68: #{basic_block_forward.1} parent=5 // pred_fallthru
      _
  $region6: #{basic_block_forward.1} parent=0 // loop_footer
    %s20 = sadd.s32 1, %s16
  $region7: #{basic_block_forward.1} parent=0 // loop_footer_branch
    %15 = sbr.rel target = $region3
  $region8: #{basic_block_forward.1} parent=0 // loop_exit
    _

</llo_original>
